<compile_context>
chip_gen: v6e
topology: v6e:2x2x1
jax: 0.10.0
libtpu: 0.0.40
codegen_flags: <defaults>
</compile_context>

<pallas_src>
import functools

import jax
import jax.numpy as jnp
from jax.experimental import pallas as pl
from jax.experimental.pallas import tpu as pltpu

_LANE = 128
_BN_EPS = 1e-5


def _round_up(x, m):
    return ((x + m - 1) // m) * m


def _vmem_limit_bytes(working_set_bytes):
    # Generous margin over the working set, but capped so it is always legal on v7x
    # (64 MiB physical VMEM per TensorCore); also raises the 16/32 MiB default on
    # v5e/v6e so large tiles are allowed.
    return int(min(max(2 * working_set_bytes, 32 << 20), 48 << 20))


def _fused_working_set(cin, cout, lp, khkw):
    x_bytes = cin * lp * 2            # bf16 image block (double-buffered)
    o_bytes = cout * lp * 4           # f32 output block (double-buffered)
    w_bytes = khkw * cout * cin * 2
    tmp_bytes = 2 * cin * lp * 4 + 2 * cout * lp * 4   # rolled views + accumulator
    return 2 * x_bytes + 2 * o_bytes + w_bytes + tmp_bytes


def _pick_tile_m(m_dim, kp, cout, *, budget=24 << 20, tm_max=2048):
    """Largest M tile (multiple of 128) whose double-buffered working set fits budget."""
    tm = _LANE
    while tm * 2 <= tm_max:
        need = 2 * kp * (tm * 2) * 2 + 2 * cout * (tm * 2) * 4 + cout * kp * 2
        if need > budget:
            break
        tm *= 2
    # Keep at least 2 grid steps when there is enough work: on v7x the parallel grid
    # axis is what shards across the 2 TensorCores.
    if m_dim > _LANE:
        tm = min(tm, _round_up((m_dim + 1) // 2, _LANE))
    tm = min(tm, _round_up(m_dim, _LANE))
    return max(tm, _LANE)


# ----------------------------------------------------------------------------
# Kernel 1: fused stride-1 conv.  One batch image per grid step, flattened padded
# spatial on lanes; kh*kw shifted taps built with pltpu.roll; lane-dense output.
# ----------------------------------------------------------------------------
def _make_fused_kernel(kh, kw, dh, dw, wp, lp, compute_dtype, with_shift, with_prelu):
    # static lane shift of each kernel tap (i, j) in the flattened (Hp*Wp) axis
    shifts = [i * dh * wp + j * dw for i in range(kh) for j in range(kw)]

    def kernel(*refs):
        x_ref, w_ref = refs[0], refs[1]
        o_ref = refs[-1]
        # Upcast once: lane rolls are done on 32-bit data (robust layout); the MXU
        # matmuls still take bf16 operands (exact re-cast of bf16 values).
        x32 = x_ref[0].astype(jnp.float32)                      # (Cin, Lp)
        acc = None
        for tap, s in enumerate(shifts):
            xs = x32 if s == 0 else pltpu.roll(x32, lp - s, axis=1)   # xs[:, p] = x[:, p+s]
            part = jnp.dot(w_ref[tap], xs.astype(compute_dtype),
                           preferred_element_type=jnp.float32)        # (Cout, Lp)
            acc = part if acc is None else acc + part
        idx = 2
        if with_shift:
            acc = acc + refs[idx][...]                           # (Cout, 1) lane-broadcast
            idx += 1
        if with_prelu:
            alpha = refs[idx][...]
            acc = jnp.where(acc > 0.0, acc, alpha * acc)
        o_ref[0] = acc.astype(o_ref.dtype)

    return kernel


# ----------------------------------------------------------------------------
# Kernel 2: tiled transposed-im2col matmul: (Cout, Kp) @ (Kp, tm) -> (Cout, tm).
# ----------------------------------------------------------------------------
def _make_matmul_kernel(with_shift, with_prelu):
    def kernel(*refs):
        w_ref, p_ref = refs[0], refs[1]
        o_ref = refs[-1]
        y = jnp.dot(w_ref[...], p_ref[...], preferred_element_type=jnp.float32)
        idx = 2
        if with_shift:
            y = y + refs[idx][...]
            idx += 1
        if with_prelu:
            alpha = refs[idx][...]
            y = jnp.where(y > 0.0, y, alpha * y)
        o_ref[...] = y.astype(o_ref.dtype)

    return kernel


# ----------------------------------------------------------------------------
# BN folding: scale folded into the conv weight, shift/alpha kept per-channel.
# ----------------------------------------------------------------------------
def _fold_bn(params, bn_act):
    weight = params["conv_weight"].astype(jnp.float32)           # (Cout, Cin, kh, kw)
    bias = params.get("conv_bias", None)
    if bn_act:
        scale = params["bn_gamma"] / jnp.sqrt(params["bn_running_var"] + _BN_EPS)
        w_eff = weight * scale[:, None, None, None]
        shift = params["bn_beta"] - params["bn_running_mean"] * scale
        if bias is not None:
            shift = shift + bias * scale
        return w_eff, shift, params["prelu_alpha"]
    if bias is not None:
        return weight, bias, None
    return weight, None, None


def conv_block_forward(x_nchw, params, *, kernel_size, stride, padding,
                       dilation=(1, 1), groups=1, bn_act=False,
                       compute_dtype=jnp.bfloat16,
                       fused_vmem_budget=24 << 20, tm_max=2048):
    """Forward pass of conv_block.  x_nchw: [N, Cin, H, W] float32."""
    if groups != 1:
        # TODO(synk): grouped / depthwise convolutions are not implemented.
        raise NotImplementedError("conv_block Pallas kernel supports groups=1 only")

    n, cin, h, w = x_nchw.shape
    kh, kw = kernel_size
    sh, sw = stride
    ph, pw = padding
    dh, dw = dilation

    w_eff, shift, alpha = _fold_bn(params, bn_act)
    cout = w_eff.shape[0]
    with_shift = shift is not None
    with_prelu = alpha is not None

    ho = (h + 2 * ph - dh * (kh - 1) - 1) // sh + 1
    wo = (w + 2 * pw - dw * (kw - 1) - 1) // sw + 1
    hp, wp_ = h + 2 * ph, w + 2 * pw

    # per-channel epilogue operands, shaped (Cout, 1) so they lane-broadcast
    extra_in, extra_specs = [], []
    if with_shift:
        extra_in.append(shift.reshape(cout, 1).astype(jnp.float32))
        extra_specs.append(pl.BlockSpec((cout, 1), lambda i: (0, 0)))
    if with_prelu:
        extra_in.append(alpha.reshape(cout, 1).astype(jnp.float32))
        extra_specs.append(pl.BlockSpec((cout, 1), lambda i: (0, 0)))

    # ---------------------- fused stride-1 path ----------------------
    lp = _round_up(hp * wp_, _LANE)
    if (sh, sw) == (1, 1) and _fused_working_set(cin, cout, lp, kh * kw) <= fused_vmem_budget:
        xp = jnp.pad(x_nchw, ((0, 0), (0, 0), (ph, ph), (pw, pw)))
        x_flat = xp.reshape(n, cin, hp * wp_)
        if lp != hp * wp_:
            x_flat = jnp.pad(x_flat, ((0, 0), (0, 0), (0, lp - hp * wp_)))
        x_flat = x_flat.astype(compute_dtype)

        # taps-major weight: (kh*kw, Cout, Cin), BN scale already folded in
        w_taps = jnp.transpose(w_eff, (2, 3, 0, 1)).reshape(kh * kw, cout, cin)
        w_taps = w_taps.astype(compute_dtype)

        kernel = _make_fused_kernel(kh, kw, dh, dw, wp_, lp, compute_dtype,
                                    with_shift, with_prelu)
        out = pl.pallas_call(
            kernel,
            out_shape=jax.ShapeDtypeStruct((n, cout, lp), jnp.float32),
            grid=(n,),
            in_specs=[
                pl.BlockSpec((1, cin, lp), lambda b: (b, 0, 0)),
                pl.BlockSpec((kh * kw, cout, cin), lambda b: (0, 0, 0)),
            ] + extra_specs,
            out_specs=pl.BlockSpec((1, cout, lp), lambda b: (b, 0, 0)),
            compiler_params=pltpu.CompilerParams(
                dimension_semantics=("parallel",),
                vmem_limit_bytes=_vmem_limit_bytes(
                    _fused_working_set(cin, cout, lp, kh * kw))),
        )(x_flat, w_taps, *extra_in)

        # (N, Cout, Hp*Wp) is already channel-major: pure slicing, no transpose.
        out = out[:, :, :hp * wp_].reshape(n, cout, hp, wp_)
        return out[:, :, :ho, :wo]

    # ---------------- tiled im2col fallback (general stride) ----------------
    xp = jnp.pad(x_nchw, ((0, 0), (0, 0), (ph, ph), (pw, pw)))
    cols = []
    for i in range(kh):
        for j in range(kw):
            cols.append(
                xp[:, :,
                   i * dh: i * dh + sh * (ho - 1) + 1: sh,
                   j * dw: j * dw + sw * (wo - 1) + 1: sw])       # (N, Cin, Ho, Wo)
    # K ordering: (tap, cin);  M ordering: (n, ho, wo)  -> patches (K, M), transposed
    patches = jnp.stack(cols, axis=0)                             # (kh*kw, N, Cin, Ho, Wo)
    patches = patches.transpose(0, 2, 1, 3, 4).reshape(kh * kw * cin, n * ho * wo)

    k_dim = kh * kw * cin
    m_dim = n * ho * wo
    kp = _round_up(k_dim, 16)                 # bf16 packs 16 sublanes per vreg
    w_mat = jnp.transpose(w_eff, (0, 2, 3, 1)).reshape(cout, k_dim)
    if kp != k_dim:
        patches = jnp.pad(patches, ((0, kp - k_dim), (0, 0)))
        w_mat = jnp.pad(w_mat, ((0, 0), (0, kp - k_dim)))

    tm = _pick_tile_m(m_dim, kp, cout, tm_max=tm_max)
    mp = _round_up(m_dim, tm)
    if mp != m_dim:
        patches = jnp.pad(patches, ((0, 0), (0, mp - m_dim)))
    patches = patches.astype(compute_dtype)
    w_mat = w_mat.astype(compute_dtype)

    work_bytes = 2 * kp * tm * 2 + 2 * cout * tm * 4 + cout * kp * 2
    kernel = _make_matmul_kernel(with_shift, with_prelu)
    out = pl.pallas_call(
        kernel,
        out_shape=jax.ShapeDtypeStruct((cout, mp), jnp.float32),
        grid=(mp // tm,),
        in_specs=[
            pl.BlockSpec((cout, kp), lambda i: (0, 0)),
            pl.BlockSpec((kp, tm), lambda i: (0, i)),
        ] + extra_specs,
        out_specs=pl.BlockSpec((cout, tm), lambda i: (0, i)),
        compiler_params=pltpu.CompilerParams(
            dimension_semantics=("parallel",),
            vmem_limit_bytes=_vmem_limit_bytes(work_bytes)),
    )(w_mat, patches, *extra_in)

    out = out[:, :m_dim].reshape(cout, n, ho, wo)
    return jnp.transpose(out, (1, 0, 2, 3))


# ----------------------------------------------------------------------------
# Deterministic parameter init (shapes from conv_block.__init__; bias=False default)
# ----------------------------------------------------------------------------
def init_params(key, in_channels, out_channels, kernel_size):
    kh, kw = kernel_size
    conv_w = jax.random.normal(
        key, (out_channels, in_channels, kh, kw), jnp.float32) * 0.1
    c = jnp.arange(out_channels, dtype=jnp.float32)
    return {
        "conv_weight": conv_w,
        # BatchNorm2d defaults (gamma=1, beta=0, mean=0, var=1), perturbed so the
        # fused BN math is actually exercised.
        "bn_gamma": 1.0 + 0.01 * c,
        "bn_beta": 0.02 * c,
        "bn_running_mean": 0.05 * (c - out_channels / 2.0),
        "bn_running_var": 1.0 + 0.1 * c,
        "prelu_alpha": jnp.full((out_channels,), 0.25, jnp.float32),  # PyTorch default
    }


# ----------------------------------------------------------------------------
# Reference (plain JAX) for correctness check
# ----------------------------------------------------------------------------
def reference_forward(x_nchw, params, *, stride, padding, dilation, bn_act):
    y = jax.lax.conv_general_dilated(
        x_nchw, params["conv_weight"],
        window_strides=stride,
        padding=[(padding[0], padding[0]), (padding[1], padding[1])],
        rhs_dilation=dilation,
        dimension_numbers=("NCHW", "OIHW", "NCHW"))
    bias = params.get("conv_bias", None)
    if bias is not None:
        y = y + bias.reshape(1, -1, 1, 1)
    if bn_act:
        g = params["bn_gamma"].reshape(1, -1, 1, 1)
        b = params["bn_beta"].reshape(1, -1, 1, 1)
        mu = params["bn_running_mean"].reshape(1, -1, 1, 1)
        var = params["bn_running_var"].reshape(1, -1, 1, 1)
        y = (y - mu) / jnp.sqrt(var + _BN_EPS) * g + b
        a = params["prelu_alpha"].reshape(1, -1, 1, 1)
        y = jnp.where(y > 0, y, a * y)
    return y


if __name__ == "__main__":
    # small shapes: batch=2, in_channels=4, out_channels=8, spatial=16x16, 3x3 conv
    N, CIN, COUT, H, W = 2, 4, 8, 16, 16
    KS = (3, 3)

    key = jax.random.PRNGKey(0)
    kx, kparam = jax.random.split(key)
    x = jax.random.normal(kx, (N, CIN, H, W), jnp.float32)
    params = init_params(kparam, CIN, COUT, KS)

    @functools.partial(jax.jit, static_argnames=("stride", "padding", "dilation", "bn_act"))
    def fwd(x, params, stride, padding, dilation, bn_act):
        return conv_block_forward(x, params, kernel_size=KS, stride=stride,
                                  padding=padding, dilation=dilation, bn_act=bn_act)

    cases = [
        ((1, 1), (1, 1), (1, 1), True),    # fused path: conv -> BN -> PReLU
        ((1, 1), (1, 1), (1, 1), False),   # fused path: conv only
        ((1, 1), (2, 2), (2, 2), True),    # fused path: dilated conv -> BN -> PReLU
        ((2, 2), (1, 1), (1, 1), True),    # im2col path: strided conv -> BN -> PReLU
        ((2, 2), (1, 1), (1, 1), False),   # im2col path: strided conv only
    ]
    for stride, padding, dilation, bn_act in cases:
        out = jax.block_until_ready(
            fwd(x, params, stride=stride, padding=padding, dilation=dilation, bn_act=bn_act))
        ref = reference_forward(x, params, stride=stride, padding=padding,
                                dilation=dilation, bn_act=bn_act)
        assert out.shape == ref.shape, (out.shape, ref.shape)
        # bf16 MXU operands (f32 accumulation) -> loosened tolerance vs f32 reference
        err = float(jnp.max(jnp.abs(out - ref)))
        assert jnp.allclose(out, ref, atol=5e-2, rtol=5e-2), (stride, padding, dilation, bn_act, err)

    print("KERNEL_OK")
</pallas_src>

<mosaic_0001>
module attributes {stable_mosaic.version = 11 : i64} {
  func.func @kernel(%arg0: i32, %arg1: memref<1x4x384xbf16, #tpu.memory_space<vmem>>, %arg2: memref<9x8x4xbf16, #tpu.memory_space<vmem>>, %arg3: memref<8x1xf32, #tpu.memory_space<vmem>>, %arg4: memref<8x1xf32, #tpu.memory_space<vmem>>, %arg5: memref<1x8x384xf32, #tpu.memory_space<vmem>>) attributes {dimension_semantics = [#tpu.dimension_semantics<parallel>], iteration_bounds = array<i64: 2>, scalar_prefetch = 0 : i64, scratch_operands = 0 : i64, tpu.core_type = #tpu.core_type<tc>, window_params = [{transform_indices = @transform_0, window_bounds = array<i64: 1, 4, 384>}, {pipeline_mode = #tpu.pipeline_mode<synchronous>, transform_indices = @transform_1, window_bounds = array<i64: 9, 8, 4>}, {pipeline_mode = #tpu.pipeline_mode<synchronous>, transform_indices = @transform_2, window_bounds = array<i64: 8, 1>}, {pipeline_mode = #tpu.pipeline_mode<synchronous>, transform_indices = @transform_3, window_bounds = array<i64: 8, 1>}, {transform_indices = @transform_4, window_bounds = array<i64: 1, 8, 384>}]} {
    %c0 = arith.constant 0 : index
    %c0_0 = arith.constant 0 : index
    %c0_1 = arith.constant 0 : index
    %0 = vector.load %arg1[%c0, %c0_0, %c0_1] : memref<1x4x384xbf16, #tpu.memory_space<vmem>>, vector<1x4x384xbf16>
    %1 = vector.shape_cast %0 : vector<1x4x384xbf16> to vector<4x384xbf16>
    %2 = arith.extf %1 : vector<4x384xbf16> to vector<4x384xf32>
    %c0_2 = arith.constant 0 : index
    %c0_3 = arith.constant 0 : index
    %c0_4 = arith.constant 0 : index
    %3 = vector.load %arg2[%c0_2, %c0_3, %c0_4] : memref<9x8x4xbf16, #tpu.memory_space<vmem>>, vector<1x8x4xbf16>
    %4 = vector.shape_cast %3 : vector<1x8x4xbf16> to vector<8x4xbf16>
    %5 = arith.truncf %2 : vector<4x384xf32> to vector<4x384xbf16>
    %cst = arith.constant dense<0.000000e+00> : vector<8x384xf32>
    %6 = tpu.matmul %4, %5, %cst {dimension_numbers = #tpu.dot_dimension_numbers<[1], [0], [0], [1], [0, 0, 1, 1], [], []>} : vector<8x4xbf16>, vector<4x384xbf16>, vector<8x384xf32> -> vector<8x384xf32>
    %c383_i32 = arith.constant 383 : i32
    %7 = tpu.dynamic_rotate %2 by %c383_i32 dim 1 : vector<4x384xf32>, i32 -> vector<4x384xf32>
    %c1 = arith.constant 1 : index
    %c0_5 = arith.constant 0 : index
    %c0_6 = arith.constant 0 : index
    %8 = vector.load %arg2[%c1, %c0_5, %c0_6] : memref<9x8x4xbf16, #tpu.memory_space<vmem>>, vector<1x8x4xbf16>
    %9 = vector.shape_cast %8 : vector<1x8x4xbf16> to vector<8x4xbf16>
    %10 = arith.truncf %7 : vector<4x384xf32> to vector<4x384xbf16>
    %cst_7 = arith.constant dense<0.000000e+00> : vector<8x384xf32>
    %11 = tpu.matmul %9, %10, %cst_7 {dimension_numbers = #tpu.dot_dimension_numbers<[1], [0], [0], [1], [0, 0, 1, 1], [], []>} : vector<8x4xbf16>, vector<4x384xbf16>, vector<8x384xf32> -> vector<8x384xf32>
    %12 = arith.addf %6, %11 : vector<8x384xf32>
    %c382_i32 = arith.constant 382 : i32
    %13 = tpu.dynamic_rotate %2 by %c382_i32 dim 1 : vector<4x384xf32>, i32 -> vector<4x384xf32>
    %c2 = arith.constant 2 : index
    %c0_8 = arith.constant 0 : index
    %c0_9 = arith.constant 0 : index
    %14 = vector.load %arg2[%c2, %c0_8, %c0_9] : memref<9x8x4xbf16, #tpu.memory_space<vmem>>, vector<1x8x4xbf16>
    %15 = vector.shape_cast %14 : vector<1x8x4xbf16> to vector<8x4xbf16>
    %16 = arith.truncf %13 : vector<4x384xf32> to vector<4x384xbf16>
    %cst_10 = arith.constant dense<0.000000e+00> : vector<8x384xf32>
    %17 = tpu.matmul %15, %16, %cst_10 {dimension_numbers = #tpu.dot_dimension_numbers<[1], [0], [0], [1], [0, 0, 1, 1], [], []>} : vector<8x4xbf16>, vector<4x384xbf16>, vector<8x384xf32> -> vector<8x384xf32>
    %18 = arith.addf %12, %17 : vector<8x384xf32>
    %c366_i32 = arith.constant 366 : i32
    %19 = tpu.dynamic_rotate %2 by %c366_i32 dim 1 : vector<4x384xf32>, i32 -> vector<4x384xf32>
    %c3 = arith.constant 3 : index
    %c0_11 = arith.constant 0 : index
    %c0_12 = arith.constant 0 : index
    %20 = vector.load %arg2[%c3, %c0_11, %c0_12] : memref<9x8x4xbf16, #tpu.memory_space<vmem>>, vector<1x8x4xbf16>
    %21 = vector.shape_cast %20 : vector<1x8x4xbf16> to vector<8x4xbf16>
    %22 = arith.truncf %19 : vector<4x384xf32> to vector<4x384xbf16>
    %cst_13 = arith.constant dense<0.000000e+00> : vector<8x384xf32>
    %23 = tpu.matmul %21, %22, %cst_13 {dimension_numbers = #tpu.dot_dimension_numbers<[1], [0], [0], [1], [0, 0, 1, 1], [], []>} : vector<8x4xbf16>, vector<4x384xbf16>, vector<8x384xf32> -> vector<8x384xf32>
    %24 = arith.addf %18, %23 : vector<8x384xf32>
    %c365_i32 = arith.constant 365 : i32
    %25 = tpu.dynamic_rotate %2 by %c365_i32 dim 1 : vector<4x384xf32>, i32 -> vector<4x384xf32>
    %c4 = arith.constant 4 : index
    %c0_14 = arith.constant 0 : index
    %c0_15 = arith.constant 0 : index
    %26 = vector.load %arg2[%c4, %c0_14, %c0_15] : memref<9x8x4xbf16, #tpu.memory_space<vmem>>, vector<1x8x4xbf16>
    %27 = vector.shape_cast %26 : vector<1x8x4xbf16> to vector<8x4xbf16>
    %28 = arith.truncf %25 : vector<4x384xf32> to vector<4x384xbf16>
    %cst_16 = arith.constant dense<0.000000e+00> : vector<8x384xf32>
    %29 = tpu.matmul %27, %28, %cst_16 {dimension_numbers = #tpu.dot_dimension_numbers<[1], [0], [0], [1], [0, 0, 1, 1], [], []>} : vector<8x4xbf16>, vector<4x384xbf16>, vector<8x384xf32> -> vector<8x384xf32>
    %30 = arith.addf %24, %29 : vector<8x384xf32>
    %c364_i32 = arith.constant 364 : i32
    %31 = tpu.dynamic_rotate %2 by %c364_i32 dim 1 : vector<4x384xf32>, i32 -> vector<4x384xf32>
    %c5 = arith.constant 5 : index
    %c0_17 = arith.constant 0 : index
    %c0_18 = arith.constant 0 : index
    %32 = vector.load %arg2[%c5, %c0_17, %c0_18] : memref<9x8x4xbf16, #tpu.memory_space<vmem>>, vector<1x8x4xbf16>
    %33 = vector.shape_cast %32 : vector<1x8x4xbf16> to vector<8x4xbf16>
    %34 = arith.truncf %31 : vector<4x384xf32> to vector<4x384xbf16>
    %cst_19 = arith.constant dense<0.000000e+00> : vector<8x384xf32>
    %35 = tpu.matmul %33, %34, %cst_19 {dimension_numbers = #tpu.dot_dimension_numbers<[1], [0], [0], [1], [0, 0, 1, 1], [], []>} : vector<8x4xbf16>, vector<4x384xbf16>, vector<8x384xf32> -> vector<8x384xf32>
    %36 = arith.addf %30, %35 : vector<8x384xf32>
    %c348_i32 = arith.constant 348 : i32
    %37 = tpu.dynamic_rotate %2 by %c348_i32 dim 1 : vector<4x384xf32>, i32 -> vector<4x384xf32>
    %c6 = arith.constant 6 : index
    %c0_20 = arith.constant 0 : index
    %c0_21 = arith.constant 0 : index
    %38 = vector.load %arg2[%c6, %c0_20, %c0_21] : memref<9x8x4xbf16, #tpu.memory_space<vmem>>, vector<1x8x4xbf16>
    %39 = vector.shape_cast %38 : vector<1x8x4xbf16> to vector<8x4xbf16>
    %40 = arith.truncf %37 : vector<4x384xf32> to vector<4x384xbf16>
    %cst_22 = arith.constant dense<0.000000e+00> : vector<8x384xf32>
    %41 = tpu.matmul %39, %40, %cst_22 {dimension_numbers = #tpu.dot_dimension_numbers<[1], [0], [0], [1], [0, 0, 1, 1], [], []>} : vector<8x4xbf16>, vector<4x384xbf16>, vector<8x384xf32> -> vector<8x384xf32>
    %42 = arith.addf %36, %41 : vector<8x384xf32>
    %c347_i32 = arith.constant 347 : i32
    %43 = tpu.dynamic_rotate %2 by %c347_i32 dim 1 : vector<4x384xf32>, i32 -> vector<4x384xf32>
    %c7 = arith.constant 7 : index
    %c0_23 = arith.constant 0 : index
    %c0_24 = arith.constant 0 : index
    %44 = vector.load %arg2[%c7, %c0_23, %c0_24] : memref<9x8x4xbf16, #tpu.memory_space<vmem>>, vector<1x8x4xbf16>
    %45 = vector.shape_cast %44 : vector<1x8x4xbf16> to vector<8x4xbf16>
    %46 = arith.truncf %43 : vector<4x384xf32> to vector<4x384xbf16>
    %cst_25 = arith.constant dense<0.000000e+00> : vector<8x384xf32>
    %47 = tpu.matmul %45, %46, %cst_25 {dimension_numbers = #tpu.dot_dimension_numbers<[1], [0], [0], [1], [0, 0, 1, 1], [], []>} : vector<8x4xbf16>, vector<4x384xbf16>, vector<8x384xf32> -> vector<8x384xf32>
    %48 = arith.addf %42, %47 : vector<8x384xf32>
    %c346_i32 = arith.constant 346 : i32
    %49 = tpu.dynamic_rotate %2 by %c346_i32 dim 1 : vector<4x384xf32>, i32 -> vector<4x384xf32>
    %c8 = arith.constant 8 : index
    %c0_26 = arith.constant 0 : index
    %c0_27 = arith.constant 0 : index
    %50 = vector.load %arg2[%c8, %c0_26, %c0_27] : memref<9x8x4xbf16, #tpu.memory_space<vmem>>, vector<1x8x4xbf16>
    %51 = vector.shape_cast %50 : vector<1x8x4xbf16> to vector<8x4xbf16>
    %52 = arith.truncf %49 : vector<4x384xf32> to vector<4x384xbf16>
    %cst_28 = arith.constant dense<0.000000e+00> : vector<8x384xf32>
    %53 = tpu.matmul %51, %52, %cst_28 {dimension_numbers = #tpu.dot_dimension_numbers<[1], [0], [0], [1], [0, 0, 1, 1], [], []>} : vector<8x4xbf16>, vector<4x384xbf16>, vector<8x384xf32> -> vector<8x384xf32>
    %54 = arith.addf %48, %53 : vector<8x384xf32>
    %c0_29 = arith.constant 0 : index
    %c0_30 = arith.constant 0 : index
    %55 = vector.load %arg3[%c0_29, %c0_30] : memref<8x1xf32, #tpu.memory_space<vmem>>, vector<8x1xf32>
    %56 = vector.broadcast %55 : vector<8x1xf32> to vector<8x384xf32>
    %57 = arith.addf %54, %56 : vector<8x384xf32>
    %c0_31 = arith.constant 0 : index
    %c0_32 = arith.constant 0 : index
    %58 = vector.load %arg4[%c0_31, %c0_32] : memref<8x1xf32, #tpu.memory_space<vmem>>, vector<8x1xf32>
    %cst_33 = arith.constant 0.000000e+00 : f32
    %59 = vector.broadcast %cst_33 : f32 to vector<8x384xf32>
    %60 = arith.cmpf ogt, %57, %59 : vector<8x384xf32>
    %61 = vector.broadcast %58 : vector<8x1xf32> to vector<8x384xf32>
    %62 = arith.mulf %61, %57 : vector<8x384xf32>
    %63 = arith.select %60, %57, %62 : vector<8x384xi1>, vector<8x384xf32>
    %c0_34 = arith.constant 0 : index
    %c0_35 = arith.constant 0 : index
    %c0_36 = arith.constant 0 : index
    %64 = vector.load %arg5[%c0_34, %c0_35, %c0_36] : memref<1x8x384xf32, #tpu.memory_space<vmem>>, vector<1x8x384xf32>
    %65 = vector.shape_cast %64 : vector<1x8x384xf32> to vector<8x384xf32>
    %66 = vector.shape_cast %63 : vector<8x384xf32> to vector<1x8x384xf32>
    tpu.vector_store %arg5[%c0_34, %c0_35, %c0_36], %66 {strides = array<i32>} : memref<1x8x384xf32, #tpu.memory_space<vmem>>, vector<1x8x384xf32>,
    return
  }
  func.func @transform_0(%arg0: i32) -> (i32, i32, i32) {
    %c0_i32 = arith.constant 0 : i32
    %c0_i32_0 = arith.constant 0 : i32
    %c0_i32_1 = arith.constant 0 : i32
    return %arg0, %c0_i32, %c0_i32_0 : i32, i32, i32
  }
  func.func @transform_1(%arg0: i32) -> (i32, i32, i32) {
    %c0_i32 = arith.constant 0 : i32
    %c0_i32_0 = arith.constant 0 : i32
    %c0_i32_1 = arith.constant 0 : i32
    %c0_i32_2 = arith.constant 0 : i32
    return %c0_i32, %c0_i32_0, %c0_i32_1 : i32, i32, i32
  }
  func.func @transform_2(%arg0: i32) -> (i32, i32) {
    %c0_i32 = arith.constant 0 : i32
    %c0_i32_0 = arith.constant 0 : i32
    %c0_i32_1 = arith.constant 0 : i32
    return %c0_i32, %c0_i32_0 : i32, i32
  }
  func.func @transform_3(%arg0: i32) -> (i32, i32) {
    %c0_i32 = arith.constant 0 : i32
    %c0_i32_0 = arith.constant 0 : i32
    %c0_i32_1 = arith.constant 0 : i32
    return %c0_i32, %c0_i32_0 : i32, i32
  }
  func.func @transform_4(%arg0: i32) -> (i32, i32, i32) {
    %c0_i32 = arith.constant 0 : i32
    %c0_i32_0 = arith.constant 0 : i32
    %c0_i32_1 = arith.constant 0 : i32
    return %arg0, %c0_i32, %c0_i32_0 : i32, i32, i32
  }
}

</mosaic_0001>

<llo_original>
// kernel: fwd.1
$region0: #{fwd.1}
  #allocation0 [shape = 'u32[]', space=smem, size = 0x4, offset = 0x4, fixed_abs, tag = 'smem constant byte address 0x4 - core index']
  #allocation1 [shape = 'u32[144,128]{1,0:T(1,128)}', space=vmem, size = 0x12000, scoped, tag = 'internal scratch']
  %s0 = inlined_call_operand.vmem [shape: bf16[2,4,384], index: 0, kind: input, shape index: {}]
  %s1 = inlined_call_operand.vmem [shape: bf16[9,8,4], index: 1, kind: input, shape index: {}]
  %s2 = inlined_call_operand.vmem [shape: f32[8,1], index: 2, kind: input, shape index: {}]
  %s3 = inlined_call_operand.vmem [shape: f32[8,1], index: 3, kind: input, shape index: {}]
  %s4 = inlined_call_operand.vmem [shape: f32[2,8,384], index: 4, kind: output, shape index: {}]
  %s5 = sld [smem:[#allocation0]]
  $region49: #{fwd.1} parent=0
    _
  %s7 = ssub.s32 1, %s5
  %s8 = scalar_select 0, %s7, %s5
  loop: start=0, step=1, limit=4
  $region2: #{fwd.1} parent=0 // loop_pre_header
    _
  $region3: #{fwd.1} parent=0 // loop_header
    %s10 = sphi 0, %s14
    %p11 = scmp.ge.s32.totalorder %s10, 4
    %s20 = sphi 0, %s22
    %s23 = sphi 0, %s20
    %s24 = sphi 0, %s23
    %s40 = sphi 0, %s24
    %s44 = sphi 0, %s44
    %s46 = sphi 0, %s44
    %s47 = sphi 0, %s46
    %s61 = sphi 0, %s47
    %s65 = sphi 0, %s65
    %s67 = sphi 0, %s65
    %s68 = sphi 0, %s67
    %s82 = sphi 0, %s68
    %s86 = sphi 0, %s86
    %s88 = sphi 0, %s86
    %s89 = sphi 0, %s88
    %s103 = sphi 0, %s89
    %s109 = sphi 0, %s111
    %s112 = sphi 0, %s109
    %s113 = sphi 0, %s112
    %s129 = sphi 0, %s113
  $region4: #{fwd.1} parent=0 // loop_header_branch
    %13 = sbr.rel (%p11) target = $region8
  $region5: #{fwd.1} parent=0 // loop_body
    %s15 = ssub.s32 %s10, 1
    %s16 = ssub.s32 %s10, 2
    %s17 = sadd.s32 %s10, 1
    %s18 = ssub.s32 %s10, %s17
    %p19 = scmp.eq.s32.totalorder %s18, 0
    %s21 = sadd.s32 %s20, 1
    %s22 = scalar_select %p19, %s20, %s21
    %p25 = pneg %p19
    %p26 = scmp.eq.s32.totalorder %s10, 1
    %p27 = por %p25, %p26
    %p28 = scmp.ne.s32.totalorder %s20, %s23
    %p29 = scmp.eq.s32.totalorder %s10, 0
    %p30 = por %p28, %p29
    %p31 = scmp.ne.s32.totalorder %s20, %s23
    %p32 = scmp.eq.s32.totalorder %s15, 1
    %p33 = por %p31, %p32
    %p34 = scmp.ne.s32.totalorder %s23, %s24
    %p35 = scmp.eq.s32.totalorder %s15, 0
    %p36 = por %p34, %p35
    %p37 = scmp.ne.s32.totalorder %s23, %s24
    %p38 = scmp.eq.s32.totalorder %s16, 1
    %p39 = por %p37, %p38
    %p41 = scmp.ne.s32.totalorder %s24, %s40
    %p42 = scmp.eq.s32.totalorder %s16, 0
    %p43 = por %p41, %p42
    %s45 = sadd.s32 %s44, 1
    %p48 = scmp.eq.s32.totalorder %s10, 1
    %p49 = scmp.ne.s32.totalorder %s44, %s46
    %p50 = scmp.eq.s32.totalorder %s10, 0
    %p51 = por %p49, %p50
    %p52 = scmp.ne.s32.totalorder %s44, %s46
    %p53 = scmp.eq.s32.totalorder %s15, 1
    %p54 = por %p52, %p53
    %p55 = scmp.ne.s32.totalorder %s46, %s47
    %p56 = scmp.eq.s32.totalorder %s15, 0
    %p57 = por %p55, %p56
    %p58 = scmp.ne.s32.totalorder %s46, %s47
    %p59 = scmp.eq.s32.totalorder %s16, 1
    %p60 = por %p58, %p59
    %p62 = scmp.ne.s32.totalorder %s47, %s61
    %p63 = scmp.eq.s32.totalorder %s16, 0
    %p64 = por %p62, %p63
    %s66 = sadd.s32 %s65, 1
    %p69 = scmp.eq.s32.totalorder %s10, 1
    %p70 = scmp.ne.s32.totalorder %s65, %s67
    %p71 = scmp.eq.s32.totalorder %s10, 0
    %p72 = por %p70, %p71
    %p73 = scmp.ne.s32.totalorder %s65, %s67
    %p74 = scmp.eq.s32.totalorder %s15, 1
    %p75 = por %p73, %p74
    %p76 = scmp.ne.s32.totalorder %s67, %s68
    %p77 = scmp.eq.s32.totalorder %s15, 0
    %p78 = por %p76, %p77
    %p79 = scmp.ne.s32.totalorder %s67, %s68
    %p80 = scmp.eq.s32.totalorder %s16, 1
    %p81 = por %p79, %p80
    %p83 = scmp.ne.s32.totalorder %s68, %s82
    %p84 = scmp.eq.s32.totalorder %s16, 0
    %p85 = por %p83, %p84
    %s87 = sadd.s32 %s86, 1
    %p90 = scmp.eq.s32.totalorder %s10, 1
    %p91 = scmp.ne.s32.totalorder %s86, %s88
    %p92 = scmp.eq.s32.totalorder %s10, 0
    %p93 = por %p91, %p92
    %p94 = scmp.ne.s32.totalorder %s86, %s88
    %p95 = scmp.eq.s32.totalorder %s15, 1
    %p96 = por %p94, %p95
    %p97 = scmp.ne.s32.totalorder %s88, %s89
    %p98 = scmp.eq.s32.totalorder %s15, 0
    %p99 = por %p97, %p98
    %p100 = scmp.ne.s32.totalorder %s88, %s89
    %p101 = scmp.eq.s32.totalorder %s16, 1
    %p102 = por %p100, %p101
    %p104 = scmp.ne.s32.totalorder %s89, %s103
    %p105 = scmp.eq.s32.totalorder %s16, 0
    %p106 = por %p104, %p105
    %s107 = ssub.s32 %s10, %s17
    %p108 = scmp.eq.s32.totalorder %s107, 0
    %s110 = sadd.s32 %s109, 1
    %s111 = scalar_select %p108, %s109, %s110
    %p114 = pneg %p108
    %p115 = scmp.eq.s32.totalorder %s10, 1
    %p116 = por %p114, %p115
    %p117 = scmp.ne.s32.totalorder %s109, %s112
    %p118 = scmp.eq.s32.totalorder %s10, 0
    %p119 = por %p117, %p118
    %p120 = scmp.ne.s32.totalorder %s109, %s112
    %p121 = scmp.eq.s32.totalorder %s15, 1
    %p122 = por %p120, %p121
    %p123 = scmp.ne.s32.totalorder %s112, %s113
    %p124 = scmp.eq.s32.totalorder %s15, 0
    %p125 = por %p123, %p124
    %p126 = scmp.ne.s32.totalorder %s112, %s113
    %p127 = scmp.eq.s32.totalorder %s16, 1
    %p128 = por %p126, %p127
    %p130 = scmp.ne.s32.totalorder %s113, %s129
    %p131 = scmp.eq.s32.totalorder %s16, 0
    %p132 = por %p130, %p131
    %p133 = scmp.le.s32.totalorder 1, %s10
    %p134 = scmp.lt.s32.totalorder %s10, 3
    %p135 = pnand %p133, %p134
    %p136 = pneg %p135
    // Predicated region
    $region9: #{fwd.1} parent=5 // pred_check
      _
    $region10: #{fwd.1} parent=5 // pred_check_branch
      %138 = sbr.rel (%p135) target = $region12
    $region11: #{fwd.1} parent=5 // pred_region
      %s139 = ssub.s32 %s10, 1
      // Predicated region
      $region13: #{fwd.1} parent=11 // pred_check
        %p140 = pneg %p57
      $region14: #{fwd.1} parent=11 // pred_check_branch
        %142 = sbr.rel (%p140) target = $region16
      $region15: #{fwd.1} parent=11 // pred_region
        _
      $region16: #{fwd.1} parent=11 // pred_fallthru
        _
      // Predicated region
      $region17: #{fwd.1} parent=11 // pred_check
        %p143 = pneg %p78
      $region18: #{fwd.1} parent=11 // pred_check_branch
        %145 = sbr.rel (%p143) target = $region20
      $region19: #{fwd.1} parent=11 // pred_region
        _
      $region20: #{fwd.1} parent=11 // pred_fallthru
        _
      // Predicated region
      $region21: #{fwd.1} parent=11 // pred_check
        %p146 = pneg %p99
      $region22: #{fwd.1} parent=11 // pred_check_branch
        %148 = sbr.rel (%p146) target = $region24
      $region23: #{fwd.1} parent=11 // pred_region
        _
      $region24: #{fwd.1} parent=11 // pred_fallthru
        _
    $region12: #{fwd.1} parent=5 // pred_fallthru
      _
    %p149 = scmp.lt.s32.totalorder %s10, 2
    // Predicated region
    $region25: #{fwd.1} parent=5 // pred_check
      %p150 = pneg %p149
    $region26: #{fwd.1} parent=5 // pred_check_branch
      %152 = sbr.rel (%p150) target = $region28
    $region27: #{fwd.1} parent=5 // pred_region
      // Predicated region
      $region29: #{fwd.1} parent=27 // pred_check
        %p153 = pneg %p30
      $region30: #{fwd.1} parent=27 // pred_check_branch
        %155 = sbr.rel (%p153) target = $region32
      $region31: #{fwd.1} parent=27 // pred_region
        %p156 = scmp.lt.s32.totalorder %s10, 1
        %s157 = scalar_select %p156, %s10, 1
        %s158 = smul.addr %s157, 3
        %s159 = smul.addr %s158, 2
        %s160 = scalar_lea.vmem %s0, %s159
      $region32: #{fwd.1} parent=27 // pred_fallthru
        _
    $region28: #{fwd.1} parent=5 // pred_fallthru
      _
    %p161 = scmp.le.s32.totalorder 1, %s10
    %p162 = scmp.lt.s32.totalorder %s10, 3
    %p163 = pnand %p161, %p162
    %p164 = pneg %p163
    // Predicated region
    $region33: #{fwd.1} parent=5 // pred_check
      _
    $region34: #{fwd.1} parent=5 // pred_check_branch
      %166 = sbr.rel (%p163) target = $region36
    $region35: #{fwd.1} parent=5 // pred_region
      %s167 = ssub.s32 %s10, 1
      %p168 = scmp.lt.s32.totalorder %s15, 1
      %s169 = scalar_select %p168, %s15, 1
      %s170 = smul.addr %s169, 3
      %s171 = smul.addr %s170, 2
      %s172 = scalar_lea.vmem %s0, %s171
      %p173 = pneg %p36
      %p174 = pneg %p33
      %p175 = pneg %p57
      %p176 = pneg %p54
      %p177 = pneg %p78
      %p178 = pneg %p75
      %p179 = pneg %p99
      %p180 = pneg %p96
      %p181 = pneg %p125
      %p182 = pneg %p122
      %p183 = scmp.lt.s32.totalorder %s15, 1
      %s184 = scalar_select %p183, %s15, 1
      %s185 = smul.addr %s184, 3
      %s186 = smul.addr %s185, 8
      %s187 = scalar_lea.vmem %s4, %s186
      %p188 = scmp.lt.s32.totalorder %s15, 1
      %s189 = scalar_select %p188, %s15, 1
      %s190 = smul.addr %s189, 3
      %s191 = smul.addr %s190, 2
      %s192 = scalar_lea.vmem %s0, %s191
      %p193 = scmp.lt.s32.totalorder %s15, 1
      %s194 = scalar_select %p193, %s15, 1
      %s195 = smul.addr %s194, 3
      %s196 = smul.addr %s195, 8
      %s197 = scalar_lea.vmem %s4, %s196
      %v199 = vld [vmem:[%s192] sm:$0x3f]
      %v200 = vunpack.c.l.bf16 %v199
      %v201 = vunpack.c.h.bf16 %v199
      %v202 = vld [vmem:[%s1] sm:$0xf]
      %v204 = vcombine.high %v200, %v200
      %206 = vrot.lane.b32.xlu0 %v200, 127
      %v207 = vpop.permute.xlu0 %206
      %208 = vrot.lane.b32.xlu0 %v204, 127
      %v209 = vpop.permute.xlu0 %208
      %210 = vrot.lane.b32.xlu0 %v201, 127
      %v211 = vpop.permute.xlu0 %210
      %v212 = vlaneseq
      %v213 = vand.u32 %v212, 127
      %vm214 = vcmp.lt.s32.totalorder %v213, 127
      %v215 = vsel %vm214, %v209, %v211
      %v216 = vsel %vm214, %v207, %v209
      %v217 = vsel %vm214, %v211, %v207
      %s218 = scalar_lea.vmem %s1, 4
      %v219 = vld [vmem:[%s218] sm:$0xf]
      %v220 = vpack.c.bf16 %v216, %v216
      %v221 = vpack.c.bf16 %v215, %v215
      %v222 = vpack.c.bf16 %v217, %v217
      %vm223 = vcmask 31744
      %v225 = vsel %vm223, %v219, 0
      %vm227 = vcmask 1041408
      %v229 = vsel %vm227, %v220, 0
      %v232 = vsel %vm227, %v221, 0
      %v235 = vsel %vm227, %v222, 0
      %237 = vmatprep.subr.bf16.mxu0 0
      %238 = vmatpush1.bf16.msra.mxu0 0
      %239 = vmatprep.subr.bf16.mxu0 0
      %240 = vmatpush1.bf16.msra.mxu0 0
      %241 = vmatprep.subr.bf16.mxu0 0
      %242 = vmatpush1.bf16.msra.mxu0 0
      %243 = vmatprep.subr.bf16.mxu0 0
      %244 = vmatpush1.bf16.msra.mxu0 0
      %245 = vmatprep.subr.bf16.mxu0 0
      %246 = vmatpush1.bf16.msra.mxu0 0
      %247 = vmatprep.subr.bf16.mxu0 0
      %248 = vmatpush1.bf16.msra.mxu0 0
      %249 = vmatprep.subr.bf16.mxu0 0
      %250 = vmatpush1.bf16.msra.mxu0 0
      %251 = vmatprep.subr.bf16.mxu0 %v232
      %252 = vmatpush1.bf16.msra.mxu0 %v229
      %253 = vmatprep.subr.bf16.mxu0 0
      %254 = vmatpush2.bf16.msra.mxu0 0
      %255 = vmatprep.subr.bf16.mxu0 0
      %256 = vmatpush2.bf16.msra.mxu0 0
      %257 = vmatprep.subr.bf16.mxu0 0
      %258 = vmatpush2.bf16.msra.mxu0 0
      %259 = vmatprep.subr.bf16.mxu0 0
      %260 = vmatpush2.bf16.msra.mxu0 0
      %261 = vmatprep.subr.bf16.mxu0 0
      %262 = vmatpush2.bf16.msra.mxu0 0
      %263 = vmatprep.subr.bf16.mxu0 0
      %264 = vmatpush2.bf16.msra.mxu0 0
      %265 = vmatprep.subr.bf16.mxu0 0
      %266 = vmatpush2.bf16.msra.mxu0 0
      %267 = vmatprep.subr.bf16.mxu0 0
      %268 = vmatpush2.bf16.msra.mxu0 0
      %269 = vmatprep.mubr.bf16.mxu0 0
      %270 = vmatmul.mubr.bf16.gmra.mxu0 %v225
      %v271 = vpop.f32.mrf.mxu0
      %v272 = vadd.f32 0.0, %v271
      %v273 = vpop.f32.mrf.mxu0
      %v274 = vadd.f32 0.0, %v273
      %v275 = vpop.f32.mrf.mxu0
      %v276 = vpop.f32.mrf.mxu0
      %277 = vdwg.mxu0
      %278 = vmatprep.subr.bf16.mxu0 0
      %279 = vmatpush1.bf16.msra.mxu0 0
      %280 = vmatprep.subr.bf16.mxu0 0
      %281 = vmatpush1.bf16.msra.mxu0 0
      %282 = vmatprep.subr.bf16.mxu0 0
      %283 = vmatpush1.bf16.msra.mxu0 0
      %284 = vmatprep.subr.bf16.mxu0 0
      %285 = vmatpush1.bf16.msra.mxu0 0
      %286 = vmatprep.subr.bf16.mxu0 0
      %287 = vmatpush1.bf16.msra.mxu0 0
      %288 = vmatprep.subr.bf16.mxu0 0
      %289 = vmatpush1.bf16.msra.mxu0 0
      %290 = vmatprep.subr.bf16.mxu0 0
      %291 = vmatpush1.bf16.msra.mxu0 0
      %292 = vmatprep.subr.bf16.mxu0 0
      %293 = vmatpush1.bf16.msra.mxu0 %v235
      %294 = vmatprep.subr.bf16.mxu0 0
      %295 = vmatpush2.bf16.msra.mxu0 0
      %296 = vmatprep.subr.bf16.mxu0 0
      %297 = vmatpush2.bf16.msra.mxu0 0
      %298 = vmatprep.subr.bf16.mxu0 0
      %299 = vmatpush2.bf16.msra.mxu0 0
      %300 = vmatprep.subr.bf16.mxu0 0
      %301 = vmatpush2.bf16.msra.mxu0 0
      %302 = vmatprep.subr.bf16.mxu0 0
      %303 = vmatpush2.bf16.msra.mxu0 0
      %304 = vmatprep.subr.bf16.mxu0 0
      %305 = vmatpush2.bf16.msra.mxu0 0
      %306 = vmatprep.subr.bf16.mxu0 0
      %307 = vmatpush2.bf16.msra.mxu0 0
      %308 = vmatprep.subr.bf16.mxu0 0
      %309 = vmatpush2.bf16.msra.mxu0 0
      %310 = vmatprep.mubr.bf16.mxu0 0
      %311 = vmatmul.mubr.bf16.gmra.mxu0 %v225
      %v312 = vpop.f32.mrf.mxu0
      %v313 = vadd.f32 0.0, %v312
      %v314 = vpop.f32.mrf.mxu0
      %v315 = vpop.f32.mrf.mxu0
      %v316 = vpop.f32.mrf.mxu0
      %317 = vdwg.mxu0
      %v319 = vcombine.high %v199, %v199
      %v321 = vunpack.c.l.s4 1983009808
      %v322 = vunpack.c.0.s8 %v321
      %v323 = vlaneseq
      %v324 = vshrl.u32 %v323, 7
      %v325 = vsub.s32 %v322, %v324
      %v326 = vrot.slane %v199, %v325
      %v328 = vunpack.c.l.s4 1983009808
      %v329 = vunpack.c.0.s8 %v328
      %v330 = vlaneseq
      %v331 = vshrl.u32 %v330, 7
      %v332 = vsub.s32 %v329, %v331
      %v333 = vrot.slane %v319, %v332
      %v334 = vcombine.high %v326, %v326
      %v336 = vsel %vm223, %v202, 0
      %v339 = vsel %vm227, %v326, 0
      %v342 = vsel %vm227, %v334, 0
      %v345 = vsel %vm227, %v333, 0
      %347 = vmatprep.subr.bf16.mxu0 0
      %348 = vmatpush1.bf16.msra.mxu0 0
      %349 = vmatprep.subr.bf16.mxu0 0
      %350 = vmatpush1.bf16.msra.mxu0 0
      %351 = vmatprep.subr.bf16.mxu0 0
      %352 = vmatpush1.bf16.msra.mxu0 0
      %353 = vmatprep.subr.bf16.mxu0 0
      %354 = vmatpush1.bf16.msra.mxu0 0
      %355 = vmatprep.subr.bf16.mxu0 0
      %356 = vmatpush1.bf16.msra.mxu0 0
      %357 = vmatprep.subr.bf16.mxu0 0
      %358 = vmatpush1.bf16.msra.mxu0 0
      %359 = vmatprep.subr.bf16.mxu0 0
      %360 = vmatpush1.bf16.msra.mxu0 0
      %361 = vmatprep.subr.bf16.mxu0 %v342
      %362 = vmatpush1.bf16.msra.mxu0 %v339
      %363 = vmatprep.subr.bf16.mxu0 0
      %364 = vmatpush2.bf16.msra.mxu0 0
      %365 = vmatprep.subr.bf16.mxu0 0
      %366 = vmatpush2.bf16.msra.mxu0 0
      %367 = vmatprep.subr.bf16.mxu0 0
      %368 = vmatpush2.bf16.msra.mxu0 0
      %369 = vmatprep.subr.bf16.mxu0 0
      %370 = vmatpush2.bf16.msra.mxu0 0
      %371 = vmatprep.subr.bf16.mxu0 0
      %372 = vmatpush2.bf16.msra.mxu0 0
      %373 = vmatprep.subr.bf16.mxu0 0
      %374 = vmatpush2.bf16.msra.mxu0 0
      %375 = vmatprep.subr.bf16.mxu0 0
      %376 = vmatpush2.bf16.msra.mxu0 0
      %377 = vmatprep.subr.bf16.mxu0 0
      %378 = vmatpush2.bf16.msra.mxu0 0
      %379 = vmatprep.mubr.bf16.mxu0 0
      %380 = vmatmul.mubr.bf16.gmra.mxu0 %v336
      %v381 = vpop.f32.mrf.mxu0
      %v382 = vadd.f32 %v272, %v381
      %v383 = vpop.f32.mrf.mxu0
      %v384 = vadd.f32 %v274, %v383
      %v385 = vpop.f32.mrf.mxu0
      %v386 = vpop.f32.mrf.mxu0
      %387 = vdwg.mxu0
      %388 = vmatprep.subr.bf16.mxu0 0
      %389 = vmatpush1.bf16.msra.mxu0 0
      %390 = vmatprep.subr.bf16.mxu0 0
      %391 = vmatpush1.bf16.msra.mxu0 0
      %392 = vmatprep.subr.bf16.mxu0 0
      %393 = vmatpush1.bf16.msra.mxu0 0
      %394 = vmatprep.subr.bf16.mxu0 0
      %395 = vmatpush1.bf16.msra.mxu0 0
      %396 = vmatprep.subr.bf16.mxu0 0
      %397 = vmatpush1.bf16.msra.mxu0 0
      %398 = vmatprep.subr.bf16.mxu0 0
      %399 = vmatpush1.bf16.msra.mxu0 0
      %400 = vmatprep.subr.bf16.mxu0 0
      %401 = vmatpush1.bf16.msra.mxu0 0
      %402 = vmatprep.subr.bf16.mxu0 0
      %403 = vmatpush1.bf16.msra.mxu0 %v345
      %404 = vmatprep.subr.bf16.mxu0 0
      %405 = vmatpush2.bf16.msra.mxu0 0
      %406 = vmatprep.subr.bf16.mxu0 0
      %407 = vmatpush2.bf16.msra.mxu0 0
      %408 = vmatprep.subr.bf16.mxu0 0
      %409 = vmatpush2.bf16.msra.mxu0 0
      %410 = vmatprep.subr.bf16.mxu0 0
      %411 = vmatpush2.bf16.msra.mxu0 0
      %412 = vmatprep.subr.bf16.mxu0 0
      %413 = vmatpush2.bf16.msra.mxu0 0
      %414 = vmatprep.subr.bf16.mxu0 0
      %415 = vmatpush2.bf16.msra.mxu0 0
      %416 = vmatprep.subr.bf16.mxu0 0
      %417 = vmatpush2.bf16.msra.mxu0 0
      %418 = vmatprep.subr.bf16.mxu0 0
      %419 = vmatpush2.bf16.msra.mxu0 0
      %420 = vmatprep.mubr.bf16.mxu0 0
      %421 = vmatmul.mubr.bf16.gmra.mxu0 %v336
      %v422 = vpop.f32.mrf.mxu0
      %v423 = vadd.f32 %v313, %v422
      %v424 = vpop.f32.mrf.mxu0
      %v425 = vpop.f32.mrf.mxu0
      %v426 = vpop.f32.mrf.mxu0
      %427 = vdwg.mxu0
      %428 = vrot.lane.b32.xlu0 %v200, 126
      %v429 = vpop.permute.xlu0 %428
      %430 = vrot.lane.b32.xlu0 %v204, 126
      %v431 = vpop.permute.xlu0 %430
      %432 = vrot.lane.b32.xlu0 %v201, 126
      %v433 = vpop.permute.xlu0 %432
      %vm434 = vcmp.lt.s32.totalorder %v213, 126
      %v435 = vsel %vm434, %v431, %v433
      %v436 = vsel %vm434, %v429, %v431
      %v437 = vsel %vm434, %v433, %v429
      %s438 = scalar_lea.vmem %s1, 8
      %v439 = vld [vmem:[%s438] sm:$0xf]
      %v440 = vpack.c.bf16 %v436, %v436
      %v441 = vpack.c.bf16 %v435, %v435
      %v442 = vpack.c.bf16 %v437, %v437
      %v444 = vsel %vm223, %v439, 0
      %v447 = vsel %vm227, %v440, 0
      %v450 = vsel %vm227, %v441, 0
      %v453 = vsel %vm227, %v442, 0
      %455 = vmatprep.subr.bf16.mxu0 0
      %456 = vmatpush1.bf16.msra.mxu0 0
      %457 = vmatprep.subr.bf16.mxu0 0
      %458 = vmatpush1.bf16.msra.mxu0 0
      %459 = vmatprep.subr.bf16.mxu0 0
      %460 = vmatpush1.bf16.msra.mxu0 0
      %461 = vmatprep.subr.bf16.mxu0 0
      %462 = vmatpush1.bf16.msra.mxu0 0
      %463 = vmatprep.subr.bf16.mxu0 0
      %464 = vmatpush1.bf16.msra.mxu0 0
      %465 = vmatprep.subr.bf16.mxu0 0
      %466 = vmatpush1.bf16.msra.mxu0 0
      %467 = vmatprep.subr.bf16.mxu0 0
      %468 = vmatpush1.bf16.msra.mxu0 0
      %469 = vmatprep.subr.bf16.mxu0 %v450
      %470 = vmatpush1.bf16.msra.mxu0 %v447
      %471 = vmatprep.subr.bf16.mxu0 0
      %472 = vmatpush2.bf16.msra.mxu0 0
      %473 = vmatprep.subr.bf16.mxu0 0
      %474 = vmatpush2.bf16.msra.mxu0 0
      %475 = vmatprep.subr.bf16.mxu0 0
      %476 = vmatpush2.bf16.msra.mxu0 0
      %477 = vmatprep.subr.bf16.mxu0 0
      %478 = vmatpush2.bf16.msra.mxu0 0
      %479 = vmatprep.subr.bf16.mxu0 0
      %480 = vmatpush2.bf16.msra.mxu0 0
      %481 = vmatprep.subr.bf16.mxu0 0
      %482 = vmatpush2.bf16.msra.mxu0 0
      %483 = vmatprep.subr.bf16.mxu0 0
      %484 = vmatpush2.bf16.msra.mxu0 0
      %485 = vmatprep.subr.bf16.mxu0 0
      %486 = vmatpush2.bf16.msra.mxu0 0
      %487 = vmatprep.mubr.bf16.mxu0 0
      %488 = vmatmul.mubr.bf16.gmra.mxu0 %v444
      %v489 = vpop.f32.mrf.mxu0
      %v490 = vadd.f32 0.0, %v489
      %v491 = vpop.f32.mrf.mxu0
      %v492 = vadd.f32 0.0, %v491
      %v493 = vpop.f32.mrf.mxu0
      %v494 = vpop.f32.mrf.mxu0
      %495 = vdwg.mxu0
      %496 = vmatprep.subr.bf16.mxu0 0
      %497 = vmatpush1.bf16.msra.mxu0 0
      %498 = vmatprep.subr.bf16.mxu0 0
      %499 = vmatpush1.bf16.msra.mxu0 0
      %500 = vmatprep.subr.bf16.mxu0 0
      %501 = vmatpush1.bf16.msra.mxu0 0
      %502 = vmatprep.subr.bf16.mxu0 0
      %503 = vmatpush1.bf16.msra.mxu0 0
      %504 = vmatprep.subr.bf16.mxu0 0
      %505 = vmatpush1.bf16.msra.mxu0 0
      %506 = vmatprep.subr.bf16.mxu0 0
      %507 = vmatpush1.bf16.msra.mxu0 0
      %508 = vmatprep.subr.bf16.mxu0 0
      %509 = vmatpush1.bf16.msra.mxu0 0
      %510 = vmatprep.subr.bf16.mxu0 0
      %511 = vmatpush1.bf16.msra.mxu0 %v453
      %512 = vmatprep.subr.bf16.mxu0 0
      %513 = vmatpush2.bf16.msra.mxu0 0
      %514 = vmatprep.subr.bf16.mxu0 0
      %515 = vmatpush2.bf16.msra.mxu0 0
      %516 = vmatprep.subr.bf16.mxu0 0
      %517 = vmatpush2.bf16.msra.mxu0 0
      %518 = vmatprep.subr.bf16.mxu0 0
      %519 = vmatpush2.bf16.msra.mxu0 0
      %520 = vmatprep.subr.bf16.mxu0 0
      %521 = vmatpush2.bf16.msra.mxu0 0
      %522 = vmatprep.subr.bf16.mxu0 0
      %523 = vmatpush2.bf16.msra.mxu0 0
      %524 = vmatprep.subr.bf16.mxu0 0
      %525 = vmatpush2.bf16.msra.mxu0 0
      %526 = vmatprep.subr.bf16.mxu0 0
      %527 = vmatpush2.bf16.msra.mxu0 0
      %528 = vmatprep.mubr.bf16.mxu0 0
      %529 = vmatmul.mubr.bf16.gmra.mxu0 %v444
      %v530 = vpop.f32.mrf.mxu0
      %v531 = vadd.f32 0.0, %v530
      %v532 = vpop.f32.mrf.mxu0
      %v533 = vpop.f32.mrf.mxu0
      %v534 = vpop.f32.mrf.mxu0
      %535 = vdwg.mxu0
      %v536 = vadd.f32 %v382, %v490
      %v537 = vadd.f32 %v384, %v492
      %v538 = vadd.f32 %v423, %v531
      %539 = vrot.lane.b32.xlu0 %v200, 110
      %v540 = vpop.permute.xlu0 %539
      %541 = vrot.lane.b32.xlu0 %v204, 110
      %v542 = vpop.permute.xlu0 %541
      %543 = vrot.lane.b32.xlu0 %v201, 110
      %v544 = vpop.permute.xlu0 %543
      %vm545 = vcmp.lt.s32.totalorder %v213, 110
      %v546 = vsel %vm545, %v542, %v544
      %v547 = vsel %vm545, %v540, %v542
      %v548 = vsel %vm545, %v544, %v540
      %s549 = scalar_lea.vmem %s1, 12
      %v550 = vld [vmem:[%s549] sm:$0xf]
      %v551 = vpack.c.bf16 %v547, %v547
      %v552 = vpack.c.bf16 %v546, %v546
      %v553 = vpack.c.bf16 %v548, %v548
      %v555 = vsel %vm223, %v550, 0
      %v558 = vsel %vm227, %v551, 0
      %v561 = vsel %vm227, %v552, 0
      %v564 = vsel %vm227, %v553, 0
      %566 = vmatprep.subr.bf16.mxu0 0
      %567 = vmatpush1.bf16.msra.mxu0 0
      %568 = vmatprep.subr.bf16.mxu0 0
      %569 = vmatpush1.bf16.msra.mxu0 0
      %570 = vmatprep.subr.bf16.mxu0 0
      %571 = vmatpush1.bf16.msra.mxu0 0
      %572 = vmatprep.subr.bf16.mxu0 0
      %573 = vmatpush1.bf16.msra.mxu0 0
      %574 = vmatprep.subr.bf16.mxu0 0
      %575 = vmatpush1.bf16.msra.mxu0 0
      %576 = vmatprep.subr.bf16.mxu0 0
      %577 = vmatpush1.bf16.msra.mxu0 0
      %578 = vmatprep.subr.bf16.mxu0 0
      %579 = vmatpush1.bf16.msra.mxu0 0
      %580 = vmatprep.subr.bf16.mxu0 %v561
      %581 = vmatpush1.bf16.msra.mxu0 %v558
      %582 = vmatprep.subr.bf16.mxu0 0
      %583 = vmatpush2.bf16.msra.mxu0 0
      %584 = vmatprep.subr.bf16.mxu0 0
      %585 = vmatpush2.bf16.msra.mxu0 0
      %586 = vmatprep.subr.bf16.mxu0 0
      %587 = vmatpush2.bf16.msra.mxu0 0
      %588 = vmatprep.subr.bf16.mxu0 0
      %589 = vmatpush2.bf16.msra.mxu0 0
      %590 = vmatprep.subr.bf16.mxu0 0
      %591 = vmatpush2.bf16.msra.mxu0 0
      %592 = vmatprep.subr.bf16.mxu0 0
      %593 = vmatpush2.bf16.msra.mxu0 0
      %594 = vmatprep.subr.bf16.mxu0 0
      %595 = vmatpush2.bf16.msra.mxu0 0
      %596 = vmatprep.subr.bf16.mxu0 0
      %597 = vmatpush2.bf16.msra.mxu0 0
      %598 = vmatprep.mubr.bf16.mxu0 0
      %599 = vmatmul.mubr.bf16.gmra.mxu0 %v555
      %v600 = vpop.f32.mrf.mxu0
      %v601 = vadd.f32 0.0, %v600
      %v602 = vpop.f32.mrf.mxu0
      %v603 = vadd.f32 0.0, %v602
      %v604 = vpop.f32.mrf.mxu0
      %v605 = vpop.f32.mrf.mxu0
      %606 = vdwg.mxu0
      %607 = vmatprep.subr.bf16.mxu0 0
      %608 = vmatpush1.bf16.msra.mxu0 0
      %609 = vmatprep.subr.bf16.mxu0 0
      %610 = vmatpush1.bf16.msra.mxu0 0
      %611 = vmatprep.subr.bf16.mxu0 0
      %612 = vmatpush1.bf16.msra.mxu0 0
      %613 = vmatprep.subr.bf16.mxu0 0
      %614 = vmatpush1.bf16.msra.mxu0 0
      %615 = vmatprep.subr.bf16.mxu0 0
      %616 = vmatpush1.bf16.msra.mxu0 0
      %617 = vmatprep.subr.bf16.mxu0 0
      %618 = vmatpush1.bf16.msra.mxu0 0
      %619 = vmatprep.subr.bf16.mxu0 0
      %620 = vmatpush1.bf16.msra.mxu0 0
      %621 = vmatprep.subr.bf16.mxu0 0
      %622 = vmatpush1.bf16.msra.mxu0 %v564
      %623 = vmatprep.subr.bf16.mxu0 0
      %624 = vmatpush2.bf16.msra.mxu0 0
      %625 = vmatprep.subr.bf16.mxu0 0
      %626 = vmatpush2.bf16.msra.mxu0 0
      %627 = vmatprep.subr.bf16.mxu0 0
      %628 = vmatpush2.bf16.msra.mxu0 0
      %629 = vmatprep.subr.bf16.mxu0 0
      %630 = vmatpush2.bf16.msra.mxu0 0
      %631 = vmatprep.subr.bf16.mxu0 0
      %632 = vmatpush2.bf16.msra.mxu0 0
      %633 = vmatprep.subr.bf16.mxu0 0
      %634 = vmatpush2.bf16.msra.mxu0 0
      %635 = vmatprep.subr.bf16.mxu0 0
      %636 = vmatpush2.bf16.msra.mxu0 0
      %637 = vmatprep.subr.bf16.mxu0 0
      %638 = vmatpush2.bf16.msra.mxu0 0
      %639 = vmatprep.mubr.bf16.mxu0 0
      %640 = vmatmul.mubr.bf16.gmra.mxu0 %v555
      %v641 = vpop.f32.mrf.mxu0
      %v642 = vadd.f32 0.0, %v641
      %v643 = vpop.f32.mrf.mxu0
      %v644 = vpop.f32.mrf.mxu0
      %v645 = vpop.f32.mrf.mxu0
      %646 = vdwg.mxu0
      %v647 = vadd.f32 %v536, %v601
      %v648 = vadd.f32 %v537, %v603
      %v649 = vadd.f32 %v538, %v642
      %650 = vrot.lane.b32.xlu0 %v200, 109
      %v651 = vpop.permute.xlu0 %650
      %652 = vrot.lane.b32.xlu0 %v204, 109
      %v653 = vpop.permute.xlu0 %652
      %654 = vrot.lane.b32.xlu0 %v201, 109
      %v655 = vpop.permute.xlu0 %654
      %vm656 = vcmp.lt.s32.totalorder %v213, 109
      %v657 = vsel %vm656, %v653, %v655
      %v658 = vsel %vm656, %v651, %v653
      %v659 = vsel %vm656, %v655, %v651
      %s660 = scalar_lea.vmem %s1, 16
      %v661 = vld [vmem:[%s660] sm:$0xf]
      %v662 = vpack.c.bf16 %v658, %v658
      %v663 = vpack.c.bf16 %v657, %v657
      %v664 = vpack.c.bf16 %v659, %v659
      %v666 = vsel %vm223, %v661, 0
      %v669 = vsel %vm227, %v662, 0
      %v672 = vsel %vm227, %v663, 0
      %v675 = vsel %vm227, %v664, 0
      %677 = vmatprep.subr.bf16.mxu0 0
      %678 = vmatpush1.bf16.msra.mxu0 0
      %679 = vmatprep.subr.bf16.mxu0 0
      %680 = vmatpush1.bf16.msra.mxu0 0
      %681 = vmatprep.subr.bf16.mxu0 0
      %682 = vmatpush1.bf16.msra.mxu0 0
      %683 = vmatprep.subr.bf16.mxu0 0
      %684 = vmatpush1.bf16.msra.mxu0 0
      %685 = vmatprep.subr.bf16.mxu0 0
      %686 = vmatpush1.bf16.msra.mxu0 0
      %687 = vmatprep.subr.bf16.mxu0 0
      %688 = vmatpush1.bf16.msra.mxu0 0
      %689 = vmatprep.subr.bf16.mxu0 0
      %690 = vmatpush1.bf16.msra.mxu0 0
      %691 = vmatprep.subr.bf16.mxu0 %v672
      %692 = vmatpush1.bf16.msra.mxu0 %v669
      %693 = vmatprep.subr.bf16.mxu0 0
      %694 = vmatpush2.bf16.msra.mxu0 0
      %695 = vmatprep.subr.bf16.mxu0 0
      %696 = vmatpush2.bf16.msra.mxu0 0
      %697 = vmatprep.subr.bf16.mxu0 0
      %698 = vmatpush2.bf16.msra.mxu0 0
      %699 = vmatprep.subr.bf16.mxu0 0
      %700 = vmatpush2.bf16.msra.mxu0 0
      %701 = vmatprep.subr.bf16.mxu0 0
      %702 = vmatpush2.bf16.msra.mxu0 0
      %703 = vmatprep.subr.bf16.mxu0 0
      %704 = vmatpush2.bf16.msra.mxu0 0
      %705 = vmatprep.subr.bf16.mxu0 0
      %706 = vmatpush2.bf16.msra.mxu0 0
      %707 = vmatprep.subr.bf16.mxu0 0
      %708 = vmatpush2.bf16.msra.mxu0 0
      %709 = vmatprep.mubr.bf16.mxu0 0
      %710 = vmatmul.mubr.bf16.gmra.mxu0 %v666
      %v711 = vpop.f32.mrf.mxu0
      %v712 = vadd.f32 0.0, %v711
      %v713 = vpop.f32.mrf.mxu0
      %v714 = vadd.f32 0.0, %v713
      %v715 = vpop.f32.mrf.mxu0
      %v716 = vpop.f32.mrf.mxu0
      %717 = vdwg.mxu0
      %718 = vmatprep.subr.bf16.mxu0 0
      %719 = vmatpush1.bf16.msra.mxu0 0
      %720 = vmatprep.subr.bf16.mxu0 0
      %721 = vmatpush1.bf16.msra.mxu0 0
      %722 = vmatprep.subr.bf16.mxu0 0
      %723 = vmatpush1.bf16.msra.mxu0 0
      %724 = vmatprep.subr.bf16.mxu0 0
      %725 = vmatpush1.bf16.msra.mxu0 0
      %726 = vmatprep.subr.bf16.mxu0 0
      %727 = vmatpush1.bf16.msra.mxu0 0
      %728 = vmatprep.subr.bf16.mxu0 0
      %729 = vmatpush1.bf16.msra.mxu0 0
      %730 = vmatprep.subr.bf16.mxu0 0
      %731 = vmatpush1.bf16.msra.mxu0 0
      %732 = vmatprep.subr.bf16.mxu0 0
      %733 = vmatpush1.bf16.msra.mxu0 %v675
      %734 = vmatprep.subr.bf16.mxu0 0
      %735 = vmatpush2.bf16.msra.mxu0 0
      %736 = vmatprep.subr.bf16.mxu0 0
      %737 = vmatpush2.bf16.msra.mxu0 0
      %738 = vmatprep.subr.bf16.mxu0 0
      %739 = vmatpush2.bf16.msra.mxu0 0
      %740 = vmatprep.subr.bf16.mxu0 0
      %741 = vmatpush2.bf16.msra.mxu0 0
      %742 = vmatprep.subr.bf16.mxu0 0
      %743 = vmatpush2.bf16.msra.mxu0 0
      %744 = vmatprep.subr.bf16.mxu0 0
      %745 = vmatpush2.bf16.msra.mxu0 0
      %746 = vmatprep.subr.bf16.mxu0 0
      %747 = vmatpush2.bf16.msra.mxu0 0
      %748 = vmatprep.subr.bf16.mxu0 0
      %749 = vmatpush2.bf16.msra.mxu0 0
      %750 = vmatprep.mubr.bf16.mxu0 0
      %751 = vmatmul.mubr.bf16.gmra.mxu0 %v666
      %v752 = vpop.f32.mrf.mxu0
      %v753 = vadd.f32 0.0, %v752
      %v754 = vpop.f32.mrf.mxu0
      %v755 = vpop.f32.mrf.mxu0
      %v756 = vpop.f32.mrf.mxu0
      %757 = vdwg.mxu0
      %v758 = vadd.f32 %v647, %v712
      %v759 = vadd.f32 %v648, %v714
      %v760 = vadd.f32 %v649, %v753
      %761 = vrot.lane.b32.xlu0 %v200, 108
      %v762 = vpop.permute.xlu0 %761
      %763 = vrot.lane.b32.xlu0 %v204, 108
      %v764 = vpop.permute.xlu0 %763
      %765 = vrot.lane.b32.xlu0 %v201, 108
      %v766 = vpop.permute.xlu0 %765
      %vm767 = vcmp.lt.s32.totalorder %v213, 108
      %v768 = vsel %vm767, %v764, %v766
      %v769 = vsel %vm767, %v762, %v764
      %v770 = vsel %vm767, %v766, %v762
      %s771 = scalar_lea.vmem %s1, 20
      %v772 = vld [vmem:[%s771] sm:$0xf]
      %v773 = vpack.c.bf16 %v769, %v769
      %v774 = vpack.c.bf16 %v768, %v768
      %v775 = vpack.c.bf16 %v770, %v770
      %v777 = vsel %vm223, %v772, 0
      %v780 = vsel %vm227, %v773, 0
      %v783 = vsel %vm227, %v774, 0
      %v786 = vsel %vm227, %v775, 0
      %788 = vmatprep.subr.bf16.mxu0 0
      %789 = vmatpush1.bf16.msra.mxu0 0
      %790 = vmatprep.subr.bf16.mxu0 0
      %791 = vmatpush1.bf16.msra.mxu0 0
      %792 = vmatprep.subr.bf16.mxu0 0
      %793 = vmatpush1.bf16.msra.mxu0 0
      %794 = vmatprep.subr.bf16.mxu0 0
      %795 = vmatpush1.bf16.msra.mxu0 0
      %796 = vmatprep.subr.bf16.mxu0 0
      %797 = vmatpush1.bf16.msra.mxu0 0
      %798 = vmatprep.subr.bf16.mxu0 0
      %799 = vmatpush1.bf16.msra.mxu0 0
      %800 = vmatprep.subr.bf16.mxu0 0
      %801 = vmatpush1.bf16.msra.mxu0 0
      %802 = vmatprep.subr.bf16.mxu0 %v783
      %803 = vmatpush1.bf16.msra.mxu0 %v780
      %804 = vmatprep.subr.bf16.mxu0 0
      %805 = vmatpush2.bf16.msra.mxu0 0
      %806 = vmatprep.subr.bf16.mxu0 0
      %807 = vmatpush2.bf16.msra.mxu0 0
      %808 = vmatprep.subr.bf16.mxu0 0
      %809 = vmatpush2.bf16.msra.mxu0 0
      %810 = vmatprep.subr.bf16.mxu0 0
      %811 = vmatpush2.bf16.msra.mxu0 0
      %812 = vmatprep.subr.bf16.mxu0 0
      %813 = vmatpush2.bf16.msra.mxu0 0
      %814 = vmatprep.subr.bf16.mxu0 0
      %815 = vmatpush2.bf16.msra.mxu0 0
      %816 = vmatprep.subr.bf16.mxu0 0
      %817 = vmatpush2.bf16.msra.mxu0 0
      %818 = vmatprep.subr.bf16.mxu0 0
      %819 = vmatpush2.bf16.msra.mxu0 0
      %820 = vmatprep.mubr.bf16.mxu0 0
      %821 = vmatmul.mubr.bf16.gmra.mxu0 %v777
      %v822 = vpop.f32.mrf.mxu0
      %v823 = vadd.f32 0.0, %v822
      %v824 = vpop.f32.mrf.mxu0
      %v825 = vadd.f32 0.0, %v824
      %v826 = vpop.f32.mrf.mxu0
      %v827 = vpop.f32.mrf.mxu0
      %828 = vdwg.mxu0
      %829 = vmatprep.subr.bf16.mxu0 0
      %830 = vmatpush1.bf16.msra.mxu0 0
      %831 = vmatprep.subr.bf16.mxu0 0
      %832 = vmatpush1.bf16.msra.mxu0 0
      %833 = vmatprep.subr.bf16.mxu0 0
      %834 = vmatpush1.bf16.msra.mxu0 0
      %835 = vmatprep.subr.bf16.mxu0 0
      %836 = vmatpush1.bf16.msra.mxu0 0
      %837 = vmatprep.subr.bf16.mxu0 0
      %838 = vmatpush1.bf16.msra.mxu0 0
      %839 = vmatprep.subr.bf16.mxu0 0
      %840 = vmatpush1.bf16.msra.mxu0 0
      %841 = vmatprep.subr.bf16.mxu0 0
      %842 = vmatpush1.bf16.msra.mxu0 0
      %843 = vmatprep.subr.bf16.mxu0 0
      %844 = vmatpush1.bf16.msra.mxu0 %v786
      %845 = vmatprep.subr.bf16.mxu0 0
      %846 = vmatpush2.bf16.msra.mxu0 0
      %847 = vmatprep.subr.bf16.mxu0 0
      %848 = vmatpush2.bf16.msra.mxu0 0
      %849 = vmatprep.subr.bf16.mxu0 0
      %850 = vmatpush2.bf16.msra.mxu0 0
      %851 = vmatprep.subr.bf16.mxu0 0
      %852 = vmatpush2.bf16.msra.mxu0 0
      %853 = vmatprep.subr.bf16.mxu0 0
      %854 = vmatpush2.bf16.msra.mxu0 0
      %855 = vmatprep.subr.bf16.mxu0 0
      %856 = vmatpush2.bf16.msra.mxu0 0
      %857 = vmatprep.subr.bf16.mxu0 0
      %858 = vmatpush2.bf16.msra.mxu0 0
      %859 = vmatprep.subr.bf16.mxu0 0
      %860 = vmatpush2.bf16.msra.mxu0 0
      %861 = vmatprep.mubr.bf16.mxu0 0
      %862 = vmatmul.mubr.bf16.gmra.mxu0 %v777
      %v863 = vpop.f32.mrf.mxu0
      %v864 = vadd.f32 0.0, %v863
      %v865 = vpop.f32.mrf.mxu0
      %v866 = vpop.f32.mrf.mxu0
      %v867 = vpop.f32.mrf.mxu0
      %868 = vdwg.mxu0
      %v869 = vadd.f32 %v758, %v823
      %v870 = vadd.f32 %v759, %v825
      %v871 = vadd.f32 %v760, %v864
      %872 = vrot.lane.b32.xlu0 %v200, 92
      %v873 = vpop.permute.xlu0 %872
      %874 = vrot.lane.b32.xlu0 %v204, 92
      %v875 = vpop.permute.xlu0 %874
      %876 = vrot.lane.b32.xlu0 %v201, 92
      %v877 = vpop.permute.xlu0 %876
      %vm878 = vcmp.lt.s32.totalorder %v213, 92
      %v879 = vsel %vm878, %v875, %v877
      %v880 = vsel %vm878, %v873, %v875
      %v881 = vsel %vm878, %v877, %v873
      %s882 = scalar_lea.vmem %s1, 24
      %v883 = vld [vmem:[%s882] sm:$0xf]
      %v884 = vpack.c.bf16 %v880, %v880
      %v885 = vpack.c.bf16 %v879, %v879
      %v886 = vpack.c.bf16 %v881, %v881
      %v888 = vsel %vm223, %v883, 0
      %v891 = vsel %vm227, %v884, 0
      %v894 = vsel %vm227, %v885, 0
      %v897 = vsel %vm227, %v886, 0
      %899 = vmatprep.subr.bf16.mxu0 0
      %900 = vmatpush1.bf16.msra.mxu0 0
      %901 = vmatprep.subr.bf16.mxu0 0
      %902 = vmatpush1.bf16.msra.mxu0 0
      %903 = vmatprep.subr.bf16.mxu0 0
      %904 = vmatpush1.bf16.msra.mxu0 0
      %905 = vmatprep.subr.bf16.mxu0 0
      %906 = vmatpush1.bf16.msra.mxu0 0
      %907 = vmatprep.subr.bf16.mxu0 0
      %908 = vmatpush1.bf16.msra.mxu0 0
      %909 = vmatprep.subr.bf16.mxu0 0
      %910 = vmatpush1.bf16.msra.mxu0 0
      %911 = vmatprep.subr.bf16.mxu0 0
      %912 = vmatpush1.bf16.msra.mxu0 0
      %913 = vmatprep.subr.bf16.mxu0 %v894
      %914 = vmatpush1.bf16.msra.mxu0 %v891
      %915 = vmatprep.subr.bf16.mxu0 0
      %916 = vmatpush2.bf16.msra.mxu0 0
      %917 = vmatprep.subr.bf16.mxu0 0
      %918 = vmatpush2.bf16.msra.mxu0 0
      %919 = vmatprep.subr.bf16.mxu0 0
      %920 = vmatpush2.bf16.msra.mxu0 0
      %921 = vmatprep.subr.bf16.mxu0 0
      %922 = vmatpush2.bf16.msra.mxu0 0
      %923 = vmatprep.subr.bf16.mxu0 0
      %924 = vmatpush2.bf16.msra.mxu0 0
      %925 = vmatprep.subr.bf16.mxu0 0
      %926 = vmatpush2.bf16.msra.mxu0 0
      %927 = vmatprep.subr.bf16.mxu0 0
      %928 = vmatpush2.bf16.msra.mxu0 0
      %929 = vmatprep.subr.bf16.mxu0 0
      %930 = vmatpush2.bf16.msra.mxu0 0
      %931 = vmatprep.mubr.bf16.mxu0 0
      %932 = vmatmul.mubr.bf16.gmra.mxu0 %v888
      %v933 = vpop.f32.mrf.mxu0
      %v934 = vadd.f32 0.0, %v933
      %v935 = vpop.f32.mrf.mxu0
      %v936 = vadd.f32 0.0, %v935
      %v937 = vpop.f32.mrf.mxu0
      %v938 = vpop.f32.mrf.mxu0
      %939 = vdwg.mxu0
      %940 = vmatprep.subr.bf16.mxu0 0
      %941 = vmatpush1.bf16.msra.mxu0 0
      %942 = vmatprep.subr.bf16.mxu0 0
      %943 = vmatpush1.bf16.msra.mxu0 0
      %944 = vmatprep.subr.bf16.mxu0 0
      %945 = vmatpush1.bf16.msra.mxu0 0
      %946 = vmatprep.subr.bf16.mxu0 0
      %947 = vmatpush1.bf16.msra.mxu0 0
      %948 = vmatprep.subr.bf16.mxu0 0
      %949 = vmatpush1.bf16.msra.mxu0 0
      %950 = vmatprep.subr.bf16.mxu0 0
      %951 = vmatpush1.bf16.msra.mxu0 0
      %952 = vmatprep.subr.bf16.mxu0 0
      %953 = vmatpush1.bf16.msra.mxu0 0
      %954 = vmatprep.subr.bf16.mxu0 0
      %955 = vmatpush1.bf16.msra.mxu0 %v897
      %956 = vmatprep.subr.bf16.mxu0 0
      %957 = vmatpush2.bf16.msra.mxu0 0
      %958 = vmatprep.subr.bf16.mxu0 0
      %959 = vmatpush2.bf16.msra.mxu0 0
      %960 = vmatprep.subr.bf16.mxu0 0
      %961 = vmatpush2.bf16.msra.mxu0 0
      %962 = vmatprep.subr.bf16.mxu0 0
      %963 = vmatpush2.bf16.msra.mxu0 0
      %964 = vmatprep.subr.bf16.mxu0 0
      %965 = vmatpush2.bf16.msra.mxu0 0
      %966 = vmatprep.subr.bf16.mxu0 0
      %967 = vmatpush2.bf16.msra.mxu0 0
      %968 = vmatprep.subr.bf16.mxu0 0
      %969 = vmatpush2.bf16.msra.mxu0 0
      %970 = vmatprep.subr.bf16.mxu0 0
      %971 = vmatpush2.bf16.msra.mxu0 0
      %972 = vmatprep.mubr.bf16.mxu0 0
      %973 = vmatmul.mubr.bf16.gmra.mxu0 %v888
      %v974 = vpop.f32.mrf.mxu0
      %v975 = vadd.f32 0.0, %v974
      %v976 = vpop.f32.mrf.mxu0
      %v977 = vpop.f32.mrf.mxu0
      %v978 = vpop.f32.mrf.mxu0
      %979 = vdwg.mxu0
      %v980 = vadd.f32 %v869, %v934
      %v981 = vadd.f32 %v870, %v936
      %v982 = vadd.f32 %v871, %v975
      %983 = vrot.lane.b32.xlu0 %v200, 91
      %v984 = vpop.permute.xlu0 %983
      %985 = vrot.lane.b32.xlu0 %v204, 91
      %v986 = vpop.permute.xlu0 %985
      %987 = vrot.lane.b32.xlu0 %v201, 91
      %v988 = vpop.permute.xlu0 %987
      %vm989 = vcmp.lt.s32.totalorder %v213, 91
      %v990 = vsel %vm989, %v986, %v988
      %v991 = vsel %vm989, %v984, %v986
      %v992 = vsel %vm989, %v988, %v984
      %s993 = scalar_lea.vmem %s1, 28
      %v994 = vld [vmem:[%s993] sm:$0xf]
      %v995 = vpack.c.bf16 %v991, %v991
      %v996 = vpack.c.bf16 %v990, %v990
      %v997 = vpack.c.bf16 %v992, %v992
      %v999 = vsel %vm223, %v994, 0
      %v1002 = vsel %vm227, %v995, 0
      %v1005 = vsel %vm227, %v996, 0
      %v1008 = vsel %vm227, %v997, 0
      %1010 = vmatprep.subr.bf16.mxu0 0
      %1011 = vmatpush1.bf16.msra.mxu0 0
      %1012 = vmatprep.subr.bf16.mxu0 0
      %1013 = vmatpush1.bf16.msra.mxu0 0
      %1014 = vmatprep.subr.bf16.mxu0 0
      %1015 = vmatpush1.bf16.msra.mxu0 0
      %1016 = vmatprep.subr.bf16.mxu0 0
      %1017 = vmatpush1.bf16.msra.mxu0 0
      %1018 = vmatprep.subr.bf16.mxu0 0
      %1019 = vmatpush1.bf16.msra.mxu0 0
      %1020 = vmatprep.subr.bf16.mxu0 0
      %1021 = vmatpush1.bf16.msra.mxu0 0
      %1022 = vmatprep.subr.bf16.mxu0 0
      %1023 = vmatpush1.bf16.msra.mxu0 0
      %1024 = vmatprep.subr.bf16.mxu0 %v1005
      %1025 = vmatpush1.bf16.msra.mxu0 %v1002
      %1026 = vmatprep.subr.bf16.mxu0 0
      %1027 = vmatpush2.bf16.msra.mxu0 0
      %1028 = vmatprep.subr.bf16.mxu0 0
      %1029 = vmatpush2.bf16.msra.mxu0 0
      %1030 = vmatprep.subr.bf16.mxu0 0
      %1031 = vmatpush2.bf16.msra.mxu0 0
      %1032 = vmatprep.subr.bf16.mxu0 0
      %1033 = vmatpush2.bf16.msra.mxu0 0
      %1034 = vmatprep.subr.bf16.mxu0 0
      %1035 = vmatpush2.bf16.msra.mxu0 0
      %1036 = vmatprep.subr.bf16.mxu0 0
      %1037 = vmatpush2.bf16.msra.mxu0 0
      %1038 = vmatprep.subr.bf16.mxu0 0
      %1039 = vmatpush2.bf16.msra.mxu0 0
      %1040 = vmatprep.subr.bf16.mxu0 0
      %1041 = vmatpush2.bf16.msra.mxu0 0
      %1042 = vmatprep.mubr.bf16.mxu0 0
      %1043 = vmatmul.mubr.bf16.gmra.mxu0 %v999
      %v1044 = vpop.f32.mrf.mxu0
      %v1045 = vadd.f32 0.0, %v1044
      %v1046 = vpop.f32.mrf.mxu0
      %v1047 = vadd.f32 0.0, %v1046
      %v1048 = vpop.f32.mrf.mxu0
      %v1049 = vpop.f32.mrf.mxu0
      %1050 = vdwg.mxu0
      %1051 = vmatprep.subr.bf16.mxu0 0
      %1052 = vmatpush1.bf16.msra.mxu0 0
      %1053 = vmatprep.subr.bf16.mxu0 0
      %1054 = vmatpush1.bf16.msra.mxu0 0
      %1055 = vmatprep.subr.bf16.mxu0 0
      %1056 = vmatpush1.bf16.msra.mxu0 0
      %1057 = vmatprep.subr.bf16.mxu0 0
      %1058 = vmatpush1.bf16.msra.mxu0 0
      %1059 = vmatprep.subr.bf16.mxu0 0
      %1060 = vmatpush1.bf16.msra.mxu0 0
      %1061 = vmatprep.subr.bf16.mxu0 0
      %1062 = vmatpush1.bf16.msra.mxu0 0
      %1063 = vmatprep.subr.bf16.mxu0 0
      %1064 = vmatpush1.bf16.msra.mxu0 0
      %1065 = vmatprep.subr.bf16.mxu0 0
      %1066 = vmatpush1.bf16.msra.mxu0 %v1008
      %1067 = vmatprep.subr.bf16.mxu0 0
      %1068 = vmatpush2.bf16.msra.mxu0 0
      %1069 = vmatprep.subr.bf16.mxu0 0
      %1070 = vmatpush2.bf16.msra.mxu0 0
      %1071 = vmatprep.subr.bf16.mxu0 0
      %1072 = vmatpush2.bf16.msra.mxu0 0
      %1073 = vmatprep.subr.bf16.mxu0 0
      %1074 = vmatpush2.bf16.msra.mxu0 0
      %1075 = vmatprep.subr.bf16.mxu0 0
      %1076 = vmatpush2.bf16.msra.mxu0 0
      %1077 = vmatprep.subr.bf16.mxu0 0
      %1078 = vmatpush2.bf16.msra.mxu0 0
      %1079 = vmatprep.subr.bf16.mxu0 0
      %1080 = vmatpush2.bf16.msra.mxu0 0
      %1081 = vmatprep.subr.bf16.mxu0 0
      %1082 = vmatpush2.bf16.msra.mxu0 0
      %1083 = vmatprep.mubr.bf16.mxu0 0
      %1084 = vmatmul.mubr.bf16.gmra.mxu0 %v999
      %v1085 = vpop.f32.mrf.mxu0
      %v1086 = vadd.f32 0.0, %v1085
      %v1087 = vpop.f32.mrf.mxu0
      %v1088 = vpop.f32.mrf.mxu0
      %v1089 = vpop.f32.mrf.mxu0
      %1090 = vdwg.mxu0
      %v1091 = vadd.f32 %v980, %v1045
      %v1092 = vadd.f32 %v981, %v1047
      %v1093 = vadd.f32 %v982, %v1086
      %1094 = vrot.lane.b32.xlu0 %v200, 90
      %v1095 = vpop.permute.xlu0 %1094
      %1096 = vrot.lane.b32.xlu0 %v204, 90
      %v1097 = vpop.permute.xlu0 %1096
      %1098 = vrot.lane.b32.xlu0 %v201, 90
      %v1099 = vpop.permute.xlu0 %1098
      %vm1100 = vcmp.lt.s32.totalorder %v213, 90
      %v1101 = vsel %vm1100, %v1097, %v1099
      %v1102 = vsel %vm1100, %v1095, %v1097
      %v1103 = vsel %vm1100, %v1099, %v1095
      %s1104 = scalar_lea.vmem %s1, 32
      %v1105 = vld [vmem:[%s1104] sm:$0xf]
      %v1106 = vpack.c.bf16 %v1102, %v1102
      %v1107 = vpack.c.bf16 %v1101, %v1101
      %v1108 = vpack.c.bf16 %v1103, %v1103
      %v1110 = vsel %vm223, %v1105, 0
      %v1113 = vsel %vm227, %v1106, 0
      %v1116 = vsel %vm227, %v1107, 0
      %v1119 = vsel %vm227, %v1108, 0
      %1121 = vmatprep.subr.bf16.mxu0 0
      %1122 = vmatpush1.bf16.msra.mxu0 0
      %1123 = vmatprep.subr.bf16.mxu0 0
      %1124 = vmatpush1.bf16.msra.mxu0 0
      %1125 = vmatprep.subr.bf16.mxu0 0
      %1126 = vmatpush1.bf16.msra.mxu0 0
      %1127 = vmatprep.subr.bf16.mxu0 0
      %1128 = vmatpush1.bf16.msra.mxu0 0
      %1129 = vmatprep.subr.bf16.mxu0 0
      %1130 = vmatpush1.bf16.msra.mxu0 0
      %1131 = vmatprep.subr.bf16.mxu0 0
      %1132 = vmatpush1.bf16.msra.mxu0 0
      %1133 = vmatprep.subr.bf16.mxu0 0
      %1134 = vmatpush1.bf16.msra.mxu0 0
      %1135 = vmatprep.subr.bf16.mxu0 %v1116
      %1136 = vmatpush1.bf16.msra.mxu0 %v1113
      %1137 = vmatprep.subr.bf16.mxu0 0
      %1138 = vmatpush2.bf16.msra.mxu0 0
      %1139 = vmatprep.subr.bf16.mxu0 0
      %1140 = vmatpush2.bf16.msra.mxu0 0
      %1141 = vmatprep.subr.bf16.mxu0 0
      %1142 = vmatpush2.bf16.msra.mxu0 0
      %1143 = vmatprep.subr.bf16.mxu0 0
      %1144 = vmatpush2.bf16.msra.mxu0 0
      %1145 = vmatprep.subr.bf16.mxu0 0
      %1146 = vmatpush2.bf16.msra.mxu0 0
      %1147 = vmatprep.subr.bf16.mxu0 0
      %1148 = vmatpush2.bf16.msra.mxu0 0
      %1149 = vmatprep.subr.bf16.mxu0 0
      %1150 = vmatpush2.bf16.msra.mxu0 0
      %1151 = vmatprep.subr.bf16.mxu0 0
      %1152 = vmatpush2.bf16.msra.mxu0 0
      %1153 = vmatprep.mubr.bf16.mxu0 0
      %1154 = vmatmul.mubr.bf16.gmra.mxu0 %v1110
      %v1155 = vpop.f32.mrf.mxu0
      %v1156 = vadd.f32 0.0, %v1155
      %v1157 = vpop.f32.mrf.mxu0
      %v1158 = vadd.f32 0.0, %v1157
      %v1159 = vpop.f32.mrf.mxu0
      %v1160 = vpop.f32.mrf.mxu0
      %1161 = vdwg.mxu0
      %1162 = vmatprep.subr.bf16.mxu0 0
      %1163 = vmatpush1.bf16.msra.mxu0 0
      %1164 = vmatprep.subr.bf16.mxu0 0
      %1165 = vmatpush1.bf16.msra.mxu0 0
      %1166 = vmatprep.subr.bf16.mxu0 0
      %1167 = vmatpush1.bf16.msra.mxu0 0
      %1168 = vmatprep.subr.bf16.mxu0 0
      %1169 = vmatpush1.bf16.msra.mxu0 0
      %1170 = vmatprep.subr.bf16.mxu0 0
      %1171 = vmatpush1.bf16.msra.mxu0 0
      %1172 = vmatprep.subr.bf16.mxu0 0
      %1173 = vmatpush1.bf16.msra.mxu0 0
      %1174 = vmatprep.subr.bf16.mxu0 0
      %1175 = vmatpush1.bf16.msra.mxu0 0
      %1176 = vmatprep.subr.bf16.mxu0 0
      %1177 = vmatpush1.bf16.msra.mxu0 %v1119
      %1178 = vmatprep.subr.bf16.mxu0 0
      %1179 = vmatpush2.bf16.msra.mxu0 0
      %1180 = vmatprep.subr.bf16.mxu0 0
      %1181 = vmatpush2.bf16.msra.mxu0 0
      %1182 = vmatprep.subr.bf16.mxu0 0
      %1183 = vmatpush2.bf16.msra.mxu0 0
      %1184 = vmatprep.subr.bf16.mxu0 0
      %1185 = vmatpush2.bf16.msra.mxu0 0
      %1186 = vmatprep.subr.bf16.mxu0 0
      %1187 = vmatpush2.bf16.msra.mxu0 0
      %1188 = vmatprep.subr.bf16.mxu0 0
      %1189 = vmatpush2.bf16.msra.mxu0 0
      %1190 = vmatprep.subr.bf16.mxu0 0
      %1191 = vmatpush2.bf16.msra.mxu0 0
      %1192 = vmatprep.subr.bf16.mxu0 0
      %1193 = vmatpush2.bf16.msra.mxu0 0
      %1194 = vmatprep.mubr.bf16.mxu0 0
      %1195 = vmatmul.mubr.bf16.gmra.mxu0 %v1110
      %v1196 = vpop.f32.mrf.mxu0
      %v1197 = vadd.f32 0.0, %v1196
      %v1198 = vpop.f32.mrf.mxu0
      %v1199 = vpop.f32.mrf.mxu0
      %v1200 = vpop.f32.mrf.mxu0
      %1201 = vdwg.mxu0
      %v1202 = vadd.f32 %v1091, %v1156
      %v1203 = vadd.f32 %v1092, %v1158
      %v1204 = vadd.f32 %v1093, %v1197
      %v1205 = vld [vmem:[%s2] sm:$0xff]
      %1207 = vset.pattern.permute.xlu0 0
      %1208 = vperm.xlu0 %1207, %v1205
      %v1209 = vpop.permute.xlu0 %1208
      %v1211 = vadd.f32 %v1202, %v1209
      %v1212 = vadd.f32 %v1203, %v1209
      %v1213 = vadd.f32 %v1204, %v1209
      %v1214 = vld [vmem:[%s3] sm:$0xff]
      %vm1215 = vcmp.gt.f32.partialorder %v1211, 0.0
      %vm1216 = vcmp.gt.f32.partialorder %v1212, 0.0
      %vm1217 = vcmp.gt.f32.partialorder %v1213, 0.0
      %1219 = vset.pattern.permute.xlu0 0
      %1220 = vperm.xlu0 %1219, %v1214
      %v1221 = vpop.permute.xlu0 %1220
      %v1223 = vmul.f32 %v1221, %v1211
      %v1224 = vmul.f32 %v1221, %v1212
      %v1225 = vmul.f32 %v1221, %v1213
      %v1226 = vsel %vm1215, %v1211, %v1223
      %v1227 = vsel %vm1216, %v1212, %v1224
      %v1228 = vsel %vm1217, %v1213, %v1225
      %1229 = vst [vmem:[%s197] sm:$0xff] %v1226
      %1230 = vst [vmem:[%s197 + $0x8] sm:$0xff] %v1227
      %1231 = vst [vmem:[%s197 + $0x10] sm:$0xff] %v1228
      %p1232 = scmp.lt.s32.totalorder %s15, 1
      %s1233 = scalar_select %p1232, %s15, 1
      %s1234 = smul.addr %s1233, 3
      %s1235 = smul.addr %s1234, 8
      %s1236 = scalar_lea.vmem %s4, %s1235
      // Predicated region
      $region37: #{fwd.1} parent=35 // pred_check
        %p1237 = pneg %p122
      $region38: #{fwd.1} parent=35 // pred_check_branch
        %1239 = sbr.rel (%p1237) target = $region40
      $region39: #{fwd.1} parent=35 // pred_region
        _
      $region40: #{fwd.1} parent=35 // pred_fallthru
        _
    $region36: #{fwd.1} parent=5 // pred_fallthru
      _
    %p1240 = scmp.le.s32.totalorder 2, %s10
    // Predicated region
    $region41: #{fwd.1} parent=5 // pred_check
      %p1241 = pneg %p1240
    $region42: #{fwd.1} parent=5 // pred_check_branch
      %1243 = sbr.rel (%p1241) target = $region44
    $region43: #{fwd.1} parent=5 // pred_region
      %s1244 = ssub.s32 %s10, 2
      // Predicated region
      $region45: #{fwd.1} parent=43 // pred_check
        %p1245 = pneg %p128
      $region46: #{fwd.1} parent=43 // pred_check_branch
        %1247 = sbr.rel (%p1245) target = $region48
      $region47: #{fwd.1} parent=43 // pred_region
        %p1248 = scmp.lt.s32.totalorder %s16, 1
        %s1249 = scalar_select %p1248, %s16, 1
        %s1250 = smul.addr %s1249, 3
        %s1251 = smul.addr %s1250, 8
        %s1252 = scalar_lea.vmem %s4, %s1251
      $region48: #{fwd.1} parent=43 // pred_fallthru
        _
    $region44: #{fwd.1} parent=5 // pred_fallthru
      _
  $region6: #{fwd.1} parent=0 // loop_footer
    %s14 = sadd.s32 1, %s10
  $region7: #{fwd.1} parent=0 // loop_footer_branch
    %9 = sbr.rel target = $region3
  $region8: #{fwd.1} parent=0 // loop_exit
    _

</llo_original>
